<compile_context>
chip_gen: v5e
topology: v5e:2x2
jax: 0.10.0
libtpu: 0.0.40
codegen_flags: <defaults>
</compile_context>

<pallas_src>
import math

import jax
import jax.numpy as jnp
from jax.experimental import pallas as pl
from jax.experimental.pallas import tpu as pltpu

SELU_ALPHA = 1.6732632423543772848170429916717
SELU_SCALE = 1.0507009873554804934193349852946
BN_EPS = 1e-5


def _selu(x):
    return SELU_SCALE * jnp.where(x > 0, x, SELU_ALPHA * (jnp.exp(x) - 1.0))


# ---------------------------------------------------------------------------
# Kernel 1: 3x3 conv (stride 1, input pre-padded) + per-image BN partial stats
# ---------------------------------------------------------------------------
def conv_stats_kernel(xpad_ref, w_ref, b_ref, y_ref, stats_ref):
    """xpad_ref : (1, H+2, W+2, C) bf16   padded input image (one image/step)
       w_ref    : (9*C, Co)        bf16   im2col-flattened weights (ky,kx,ci)->co
       b_ref    : (1, Co)          f32    conv bias
       y_ref    : (1, H*W, Co)     f32    conv output (pre-BN)
       stats_ref: (1, 2, Co)       f32    [sum, sum_of_squares] over this image
    """
    _, HP, WP, C = xpad_ref.shape
    H, W = HP - 2, WP - 2

    x = xpad_ref[0]                                        # (HP, WP, C) bf16

    # im2col patch: 9 statically-shifted views concatenated along channels.
    parts = []
    for ky in range(3):
        for kx in range(3):
            parts.append(x[ky:ky + H, kx:kx + W, :].reshape(H * W, C))
    patch = jnp.concatenate(parts, axis=-1)                # (H*W, 9C) bf16

    # Single MXU matmul with K = 9C (instead of 9 tiny K=C matmuls).
    acc = jnp.dot(patch, w_ref[...],
                  preferred_element_type=jnp.float32)      # (H*W, Co) f32
    acc = acc + b_ref[...]
    y_ref[0, :, :] = acc

    s = jnp.sum(acc, axis=0, keepdims=True)                # (1, Co)
    s2 = jnp.sum(acc * acc, axis=0, keepdims=True)         # (1, Co)
    stats_ref[0, :, :] = jnp.concatenate([s, s2], axis=0)  # (2, Co)


def _conv_stats(xpad, w, b):
    """xpad: (N, H+2, W+2, C) bf16. Returns y (N, H*W, Co) f32, stats (N, 2, Co) f32."""
    N, HP, WP, C = xpad.shape
    H, W = HP - 2, WP - 2
    Co = w.shape[-1]
    w_mat = w.reshape(9 * C, Co).astype(jnp.bfloat16)
    return pl.pallas_call(
        conv_stats_kernel,
        out_shape=(jax.ShapeDtypeStruct((N, H * W, Co), jnp.float32),
                   jax.ShapeDtypeStruct((N, 2, Co), jnp.float32)),
        grid=(N,),
        in_specs=[
            pl.BlockSpec((1, HP, WP, C), lambda n: (n, 0, 0, 0)),
            pl.BlockSpec((9 * C, Co), lambda n: (0, 0)),
            pl.BlockSpec((1, Co), lambda n: (0, 0)),
        ],
        out_specs=(
            pl.BlockSpec((1, H * W, Co), lambda n: (n, 0, 0)),
            pl.BlockSpec((1, 2, Co), lambda n: (n, 0, 0)),
        ),
        compiler_params=pltpu.CompilerParams(
            dimension_semantics=("parallel",)),
    )(xpad, w_mat, b.astype(jnp.float32))


# ---------------------------------------------------------------------------
# Tiny per-channel glue: combine partial stats -> fused BN scale/shift vectors
# ---------------------------------------------------------------------------
def _bn_scale_shift(stats, gamma, beta, count, W):
    s = jnp.sum(stats[:, 0, :], axis=0)          # (C,)
    s2 = jnp.sum(stats[:, 1, :], axis=0)         # (C,)
    mean = s / count
    var = s2 / count - mean * mean               # biased batch variance
    inv = jax.lax.rsqrt(var + BN_EPS)
    scale_c = gamma.reshape(-1) * inv
    shift_c = beta.reshape(-1) - mean * scale_c
    C = scale_c.shape[0]
    # Tile per-channel vectors across W so they broadcast over the lane-dense
    # (H, W*C) layout used by kernel 2.
    scale = jnp.tile(scale_c, W).reshape(1, W * C)
    shift = jnp.tile(shift_c, W).reshape(1, W * C)
    return scale, shift


# ---------------------------------------------------------------------------
# Kernel 2: fused BN affine (+ residual) + SELU, lane-dense (minor dim = W*C)
# ---------------------------------------------------------------------------
def _make_bn_act_kernel(with_residual):
    def kernel(*refs):
        if with_residual:
            y_ref, scale_ref, shift_ref, res_ref, o_ref = refs
        else:
            y_ref, scale_ref, shift_ref, o_ref = refs
        z = y_ref[0, :, :] * scale_ref[...] + shift_ref[...]    # fused BN affine
        if with_residual:
            z = z + res_ref[0, :, :]
        o_ref[0, :, :] = _selu(z).astype(o_ref.dtype)
    return kernel


def _bn_act(y_ld, scale, shift, residual=None, out_dtype=jnp.float32):
    """y_ld/residual: (N, H, W*C); scale/shift: (1, W*C). Returns (N, H, W*C)."""
    N, H, WC = y_ld.shape
    TH = 16 if H % 16 == 0 else H        # 16-row tiles (bf16-safe sublane pack)
    tile = pl.BlockSpec((1, TH, WC), lambda n, r: (n, r, 0))
    vec = pl.BlockSpec((1, WC), lambda n, r: (0, 0))
    in_specs = [tile, vec, vec]
    args = [y_ld, scale, shift]
    if residual is not None:
        in_specs.append(tile)
        args.append(residual)
    return pl.pallas_call(
        _make_bn_act_kernel(residual is not None),
        out_shape=jax.ShapeDtypeStruct((N, H, WC), out_dtype),
        grid=(N, H // TH),
        in_specs=in_specs,
        out_specs=tile,
        compiler_params=pltpu.CompilerParams(
            dimension_semantics=("parallel", "parallel")),
    )(*args)


# ---------------------------------------------------------------------------
# Full module forward (NCHW in / NCHW out)
# ---------------------------------------------------------------------------
def module_forward(x_nchw, params):
    x = jnp.transpose(x_nchw, (0, 2, 3, 1)).astype(jnp.float32)   # NHWC f32
    N, H, W, C = x.shape
    cnt = N * H * W

    # ---- block 1: conv1 -> bn1 -> selu (no residual) ----
    xpad = jnp.pad(x, ((0, 0), (1, 1), (1, 1), (0, 0))).astype(jnp.bfloat16)
    y1, st1 = _conv_stats(xpad, params["w1"], params["b1"])
    sc1, sh1 = _bn_scale_shift(st1, params["g1"], params["beta1"], cnt, W)
    h = _bn_act(y1.reshape(N, H, W * C), sc1, sh1,
                out_dtype=jnp.bfloat16)                            # bf16 for conv2

    # ---- block 2: conv2 -> bn2 -> +x -> selu ----
    hpad = jnp.pad(h.reshape(N, H, W, C), ((0, 0), (1, 1), (1, 1), (0, 0)))
    y2, st2 = _conv_stats(hpad, params["w2"], params["b2"])
    sc2, sh2 = _bn_scale_shift(st2, params["g2"], params["beta2"], cnt, W)
    out = _bn_act(y2.reshape(N, H, W * C), sc2, sh2,
                  residual=x.reshape(N, H, W * C), out_dtype=jnp.float32)

    return jnp.transpose(out.reshape(N, H, W, C), (0, 3, 1, 2))    # -> NCHW


# ---------------------------------------------------------------------------
# Pure-JAX reference (correctness check only; same bf16 MXU precision)
# ---------------------------------------------------------------------------
def _ref_block(x_nhwc, w, b, gamma, beta, res):
    y = jax.lax.conv_general_dilated(
        x_nhwc.astype(jnp.bfloat16), w.astype(jnp.bfloat16),
        window_strides=(1, 1), padding="SAME",
        dimension_numbers=("NHWC", "HWIO", "NHWC"),
        preferred_element_type=jnp.float32)
    y = y + b.reshape(1, 1, 1, -1)
    mean = jnp.mean(y, axis=(0, 1, 2), keepdims=True)
    var = jnp.mean((y - mean) ** 2, axis=(0, 1, 2), keepdims=True)
    y = (y - mean) * jax.lax.rsqrt(var + BN_EPS)
    y = y * gamma.reshape(1, 1, 1, -1) + beta.reshape(1, 1, 1, -1)
    if res is not None:
        y = y + res
    return _selu(y)


def _ref_forward(x_nchw, params):
    x = jnp.transpose(x_nchw, (0, 2, 3, 1)).astype(jnp.float32)
    h = _ref_block(x, params["w1"], params["b1"], params["g1"],
                   params["beta1"], None)
    h = h.astype(jnp.bfloat16).astype(jnp.float32)
    out = _ref_block(h, params["w2"], params["b2"], params["g2"],
                     params["beta2"], x)
    return jnp.transpose(out, (0, 3, 1, 2))


def init_params(key, hidden_size):
    bound = 1.0 / math.sqrt(hidden_size * 3 * 3)
    ks = jax.random.split(key, 4)
    C = hidden_size
    return {
        "w1": jax.random.uniform(ks[0], (3, 3, C, C), jnp.float32, -bound, bound),
        "b1": jax.random.uniform(ks[1], (1, C), jnp.float32, -bound, bound),
        "g1": jnp.ones((1, C), jnp.float32),
        "beta1": jnp.zeros((1, C), jnp.float32),
        "w2": jax.random.uniform(ks[2], (3, 3, C, C), jnp.float32, -bound, bound),
        "b2": jax.random.uniform(ks[3], (1, C), jnp.float32, -bound, bound),
        "g2": jnp.ones((1, C), jnp.float32),
        "beta2": jnp.zeros((1, C), jnp.float32),
    }


if __name__ == "__main__":
    hidden_size = 32
    N, H, W = 2, 16, 16

    key = jax.random.PRNGKey(0)
    k_params, k_x = jax.random.split(key)
    params = init_params(k_params, hidden_size)
    x = jax.random.normal(k_x, (N, hidden_size, H, W), jnp.float32)  # NCHW

    fwd = jax.jit(module_forward)
    out = jax.block_until_ready(fwd(x, params))
    ref = jax.block_until_ready(_ref_forward(x, params))

    assert out.shape == (N, hidden_size, H, W)
    assert out.dtype == jnp.float32
    err = float(jnp.max(jnp.abs(out - ref)))
    assert err < 1e-2, err

    print("KERNEL_OK")
</pallas_src>

<mosaic_0001>
module attributes {stable_mosaic.version = 11 : i64} {
  func.func @conv_stats_kernel(%arg0: i32, %arg1: memref<1x18x18x32xbf16, #tpu.memory_space<vmem>>, %arg2: memref<288x32xbf16, #tpu.memory_space<vmem>>, %arg3: memref<1x32xf32, #tpu.memory_space<vmem>>, %arg4: memref<1x256x32xf32, #tpu.memory_space<vmem>>, %arg5: memref<1x2x32xf32, #tpu.memory_space<vmem>>) attributes {dimension_semantics = [#tpu.dimension_semantics<parallel>], iteration_bounds = array<i64: 2>, scalar_prefetch = 0 : i64, scratch_operands = 0 : i64, tpu.core_type = #tpu.core_type<tc>, window_params = [{transform_indices = @transform_0, window_bounds = array<i64: 1, 18, 18, 32>}, {pipeline_mode = #tpu.pipeline_mode<synchronous>, transform_indices = @transform_1, window_bounds = array<i64: 288, 32>}, {pipeline_mode = #tpu.pipeline_mode<synchronous>, transform_indices = @transform_2, window_bounds = array<i64: 1, 32>}, {transform_indices = @transform_3, window_bounds = array<i64: 1, 256, 32>}, {transform_indices = @transform_4, window_bounds = array<i64: 1, 2, 32>}]} {
    %c0 = arith.constant 0 : index
    %c0_0 = arith.constant 0 : index
    %c0_1 = arith.constant 0 : index
    %c0_2 = arith.constant 0 : index
    %0 = vector.load %arg1[%c0, %c0_0, %c0_1, %c0_2] : memref<1x18x18x32xbf16, #tpu.memory_space<vmem>>, vector<1x18x18x32xbf16>
    %1 = vector.shape_cast %0 : vector<1x18x18x32xbf16> to vector<18x18x32xbf16>
    %2 = vector.extract_strided_slice %1 {offsets = [0, 0, 0], sizes = [16, 16, 32], strides = [1, 1, 1]} : vector<18x18x32xbf16> to vector<16x16x32xbf16>
    %3 = vector.shape_cast %2 : vector<16x16x32xbf16> to vector<256x32xbf16>
    %4 = vector.extract_strided_slice %1 {offsets = [0, 1, 0], sizes = [16, 16, 32], strides = [1, 1, 1]} : vector<18x18x32xbf16> to vector<16x16x32xbf16>
    %5 = vector.shape_cast %4 : vector<16x16x32xbf16> to vector<256x32xbf16>
    %6 = vector.extract_strided_slice %1 {offsets = [0, 2, 0], sizes = [16, 16, 32], strides = [1, 1, 1]} : vector<18x18x32xbf16> to vector<16x16x32xbf16>
    %7 = vector.shape_cast %6 : vector<16x16x32xbf16> to vector<256x32xbf16>
    %8 = vector.extract_strided_slice %1 {offsets = [1, 0, 0], sizes = [16, 16, 32], strides = [1, 1, 1]} : vector<18x18x32xbf16> to vector<16x16x32xbf16>
    %9 = vector.shape_cast %8 : vector<16x16x32xbf16> to vector<256x32xbf16>
    %10 = vector.extract_strided_slice %1 {offsets = [1, 1, 0], sizes = [16, 16, 32], strides = [1, 1, 1]} : vector<18x18x32xbf16> to vector<16x16x32xbf16>
    %11 = vector.shape_cast %10 : vector<16x16x32xbf16> to vector<256x32xbf16>
    %12 = vector.extract_strided_slice %1 {offsets = [1, 2, 0], sizes = [16, 16, 32], strides = [1, 1, 1]} : vector<18x18x32xbf16> to vector<16x16x32xbf16>
    %13 = vector.shape_cast %12 : vector<16x16x32xbf16> to vector<256x32xbf16>
    %14 = vector.extract_strided_slice %1 {offsets = [2, 0, 0], sizes = [16, 16, 32], strides = [1, 1, 1]} : vector<18x18x32xbf16> to vector<16x16x32xbf16>
    %15 = vector.shape_cast %14 : vector<16x16x32xbf16> to vector<256x32xbf16>
    %16 = vector.extract_strided_slice %1 {offsets = [2, 1, 0], sizes = [16, 16, 32], strides = [1, 1, 1]} : vector<18x18x32xbf16> to vector<16x16x32xbf16>
    %17 = vector.shape_cast %16 : vector<16x16x32xbf16> to vector<256x32xbf16>
    %18 = vector.extract_strided_slice %1 {offsets = [2, 2, 0], sizes = [16, 16, 32], strides = [1, 1, 1]} : vector<18x18x32xbf16> to vector<16x16x32xbf16>
    %19 = vector.shape_cast %18 : vector<16x16x32xbf16> to vector<256x32xbf16>
    %20 = tpu.concatenate %3, %5, %7, %9, %11, %13, %15, %17, %19 in 1 : vector<256x32xbf16>, vector<256x32xbf16>, vector<256x32xbf16>, vector<256x32xbf16>, vector<256x32xbf16>, vector<256x32xbf16>, vector<256x32xbf16>, vector<256x32xbf16>, vector<256x32xbf16> -> vector<256x288xbf16>
    %c0_3 = arith.constant 0 : index
    %c0_4 = arith.constant 0 : index
    %21 = vector.load %arg2[%c0_3, %c0_4] : memref<288x32xbf16, #tpu.memory_space<vmem>>, vector<288x32xbf16>
    %cst = arith.constant dense<0.000000e+00> : vector<256x32xf32>
    %22 = tpu.matmul %20, %21, %cst {dimension_numbers = #tpu.dot_dimension_numbers<[1], [0], [0], [1], [0, 0, 1, 1], [], []>} : vector<256x288xbf16>, vector<288x32xbf16>, vector<256x32xf32> -> vector<256x32xf32>
    %c0_5 = arith.constant 0 : index
    %c0_6 = arith.constant 0 : index
    %23 = vector.load %arg3[%c0_5, %c0_6] : memref<1x32xf32, #tpu.memory_space<vmem>>, vector<1x32xf32>
    %24 = vector.broadcast %23 : vector<1x32xf32> to vector<256x32xf32>
    %25 = arith.addf %22, %24 : vector<256x32xf32>
    %c0_7 = arith.constant 0 : index
    %c0_8 = arith.constant 0 : index
    %c0_9 = arith.constant 0 : index
    %26 = vector.load %arg4[%c0_7, %c0_8, %c0_9] : memref<1x256x32xf32, #tpu.memory_space<vmem>>, vector<1x256x32xf32>
    %27 = vector.shape_cast %26 : vector<1x256x32xf32> to vector<256x32xf32>
    %28 = vector.shape_cast %25 : vector<256x32xf32> to vector<1x256x32xf32>
    tpu.vector_store %arg4[%c0_7, %c0_8, %c0_9], %28 {strides = array<i32>} : memref<1x256x32xf32, #tpu.memory_space<vmem>>, vector<1x256x32xf32>,
    %cst_10 = arith.constant dense<0.000000e+00> : vector<32xf32>
    %29 = vector.multi_reduction <add>, %25, %cst_10 [0] : vector<256x32xf32> to vector<32xf32>
    %30 = vector.shape_cast %29 : vector<32xf32> to vector<1x32xf32>
    %31 = arith.mulf %25, %25 : vector<256x32xf32>
    %cst_11 = arith.constant dense<0.000000e+00> : vector<32xf32>
    %32 = vector.multi_reduction <add>, %31, %cst_11 [0] : vector<256x32xf32> to vector<32xf32>
    %33 = vector.shape_cast %32 : vector<32xf32> to vector<1x32xf32>
    %34 = tpu.concatenate %30, %33 in 0 : vector<1x32xf32>, vector<1x32xf32> -> vector<2x32xf32>
    %c0_12 = arith.constant 0 : index
    %c0_13 = arith.constant 0 : index
    %c0_14 = arith.constant 0 : index
    %35 = vector.load %arg5[%c0_12, %c0_13, %c0_14] : memref<1x2x32xf32, #tpu.memory_space<vmem>>, vector<1x2x32xf32>
    %36 = vector.shape_cast %35 : vector<1x2x32xf32> to vector<2x32xf32>
    %37 = vector.shape_cast %34 : vector<2x32xf32> to vector<1x2x32xf32>
    tpu.vector_store %arg5[%c0_12, %c0_13, %c0_14], %37 {strides = array<i32>} : memref<1x2x32xf32, #tpu.memory_space<vmem>>, vector<1x2x32xf32>,
    return
  }
  func.func @transform_0(%arg0: i32) -> (i32, i32, i32, i32) {
    %c0_i32 = arith.constant 0 : i32
    %c0_i32_0 = arith.constant 0 : i32
    %c0_i32_1 = arith.constant 0 : i32
    %c0_i32_2 = arith.constant 0 : i32
    return %arg0, %c0_i32, %c0_i32_0, %c0_i32_1 : i32, i32, i32, i32
  }
  func.func @transform_1(%arg0: i32) -> (i32, i32) {
    %c0_i32 = arith.constant 0 : i32
    %c0_i32_0 = arith.constant 0 : i32
    %c0_i32_1 = arith.constant 0 : i32
    return %c0_i32, %c0_i32_0 : i32, i32
  }
  func.func @transform_2(%arg0: i32) -> (i32, i32) {
    %c0_i32 = arith.constant 0 : i32
    %c0_i32_0 = arith.constant 0 : i32
    %c0_i32_1 = arith.constant 0 : i32
    return %c0_i32, %c0_i32_0 : i32, i32
  }
  func.func @transform_3(%arg0: i32) -> (i32, i32, i32) {
    %c0_i32 = arith.constant 0 : i32
    %c0_i32_0 = arith.constant 0 : i32
    %c0_i32_1 = arith.constant 0 : i32
    return %arg0, %c0_i32, %c0_i32_0 : i32, i32, i32
  }
  func.func @transform_4(%arg0: i32) -> (i32, i32, i32) {
    %c0_i32 = arith.constant 0 : i32
    %c0_i32_0 = arith.constant 0 : i32
    %c0_i32_1 = arith.constant 0 : i32
    return %arg0, %c0_i32, %c0_i32_0 : i32, i32, i32
  }
}

module attributes {stable_mosaic.version = 11 : i64} {
  func.func @kernel(%arg0: i32, %arg1: i32, %arg2: memref<1x16x512xf32, #tpu.memory_space<vmem>>, %arg3: memref<1x512xf32, #tpu.memory_space<vmem>>, %arg4: memref<1x512xf32, #tpu.memory_space<vmem>>, %arg5: memref<1x16x512xbf16, #tpu.memory_space<vmem>>) attributes {dimension_semantics = [#tpu.dimension_semantics<parallel>, #tpu.dimension_semantics<parallel>], iteration_bounds = array<i64: 2, 1>, scalar_prefetch = 0 : i64, scratch_operands = 0 : i64, tpu.core_type = #tpu.core_type<tc>, window_params = [{transform_indices = @transform_0, window_bounds = array<i64: 1, 16, 512>}, {pipeline_mode = #tpu.pipeline_mode<synchronous>, transform_indices = @transform_1, window_bounds = array<i64: 1, 512>}, {pipeline_mode = #tpu.pipeline_mode<synchronous>, transform_indices = @transform_2, window_bounds = array<i64: 1, 512>}, {transform_indices = @transform_3, window_bounds = array<i64: 1, 16, 512>}]} {
    %c0 = arith.constant 0 : index
    %c0_0 = arith.constant 0 : index
    %c0_1 = arith.constant 0 : index
    %0 = vector.load %arg2[%c0, %c0_0, %c0_1] : memref<1x16x512xf32, #tpu.memory_space<vmem>>, vector<1x16x512xf32>
    %1 = vector.shape_cast %0 : vector<1x16x512xf32> to vector<16x512xf32>
    %c0_2 = arith.constant 0 : index
    %c0_3 = arith.constant 0 : index
    %2 = vector.load %arg3[%c0_2, %c0_3] : memref<1x512xf32, #tpu.memory_space<vmem>>, vector<1x512xf32>
    %3 = vector.broadcast %2 : vector<1x512xf32> to vector<16x512xf32>
    %4 = arith.mulf %1, %3 : vector<16x512xf32>
    %c0_4 = arith.constant 0 : index
    %c0_5 = arith.constant 0 : index
    %5 = vector.load %arg4[%c0_4, %c0_5] : memref<1x512xf32, #tpu.memory_space<vmem>>, vector<1x512xf32>
    %6 = vector.broadcast %5 : vector<1x512xf32> to vector<16x512xf32>
    %7 = arith.addf %4, %6 : vector<16x512xf32>
    %cst = arith.constant 0.000000e+00 : f32
    %8 = vector.broadcast %cst : f32 to vector<16x512xf32>
    %9 = arith.cmpf ogt, %7, %8 : vector<16x512xf32>
    %10 = math.exp %7 : vector<16x512xf32>
    %cst_6 = arith.constant 1.000000e+00 : f32
    %11 = vector.broadcast %cst_6 : f32 to vector<16x512xf32>
    %12 = arith.subf %10, %11 : vector<16x512xf32>
    %cst_7 = arith.constant 1.67326319 : f32
    %13 = vector.broadcast %cst_7 : f32 to vector<16x512xf32>
    %14 = arith.mulf %13, %12 : vector<16x512xf32>
    %15 = arith.select %9, %7, %14 : vector<16x512xi1>, vector<16x512xf32>
    %cst_8 = arith.constant 1.05070102 : f32
    %16 = vector.broadcast %cst_8 : f32 to vector<16x512xf32>
    %17 = arith.mulf %16, %15 : vector<16x512xf32>
    %18 = arith.truncf %17 : vector<16x512xf32> to vector<16x512xbf16>
    %c0_9 = arith.constant 0 : index
    %c0_10 = arith.constant 0 : index
    %c0_11 = arith.constant 0 : index
    %19 = vector.load %arg5[%c0_9, %c0_10, %c0_11] : memref<1x16x512xbf16, #tpu.memory_space<vmem>>, vector<1x16x512xbf16>
    %20 = vector.shape_cast %19 : vector<1x16x512xbf16> to vector<16x512xbf16>
    %21 = vector.shape_cast %18 : vector<16x512xbf16> to vector<1x16x512xbf16>
    tpu.vector_store %arg5[%c0_9, %c0_10, %c0_11], %21 {strides = array<i32>} : memref<1x16x512xbf16, #tpu.memory_space<vmem>>, vector<1x16x512xbf16>,
    return
  }
  func.func @transform_0(%arg0: i32, %arg1: i32) -> (i32, i32, i32) {
    %c0_i32 = arith.constant 0 : i32
    %c0_i32_0 = arith.constant 0 : i32
    return %arg0, %arg1, %c0_i32 : i32, i32, i32
  }
  func.func @transform_1(%arg0: i32, %arg1: i32) -> (i32, i32) {
    %c0_i32 = arith.constant 0 : i32
    %c0_i32_0 = arith.constant 0 : i32
    %c0_i32_1 = arith.constant 0 : i32
    return %c0_i32, %c0_i32_0 : i32, i32
  }
  func.func @transform_2(%arg0: i32, %arg1: i32) -> (i32, i32) {
    %c0_i32 = arith.constant 0 : i32
    %c0_i32_0 = arith.constant 0 : i32
    %c0_i32_1 = arith.constant 0 : i32
    return %c0_i32, %c0_i32_0 : i32, i32
  }
  func.func @transform_3(%arg0: i32, %arg1: i32) -> (i32, i32, i32) {
    %c0_i32 = arith.constant 0 : i32
    %c0_i32_0 = arith.constant 0 : i32
    return %arg0, %arg1, %c0_i32 : i32, i32, i32
  }
}

module attributes {stable_mosaic.version = 11 : i64} {
  func.func @kernel(%arg0: i32, %arg1: i32, %arg2: memref<1x16x512xf32, #tpu.memory_space<vmem>>, %arg3: memref<1x512xf32, #tpu.memory_space<vmem>>, %arg4: memref<1x512xf32, #tpu.memory_space<vmem>>, %arg5: memref<1x16x512xf32, #tpu.memory_space<vmem>>, %arg6: memref<1x16x512xf32, #tpu.memory_space<vmem>>) attributes {dimension_semantics = [#tpu.dimension_semantics<parallel>, #tpu.dimension_semantics<parallel>], iteration_bounds = array<i64: 2, 1>, scalar_prefetch = 0 : i64, scratch_operands = 0 : i64, tpu.core_type = #tpu.core_type<tc>, window_params = [{transform_indices = @transform_0, window_bounds = array<i64: 1, 16, 512>}, {pipeline_mode = #tpu.pipeline_mode<synchronous>, transform_indices = @transform_1, window_bounds = array<i64: 1, 512>}, {pipeline_mode = #tpu.pipeline_mode<synchronous>, transform_indices = @transform_2, window_bounds = array<i64: 1, 512>}, {transform_indices = @transform_3, window_bounds = array<i64: 1, 16, 512>}, {transform_indices = @transform_4, window_bounds = array<i64: 1, 16, 512>}]} {
    %c0 = arith.constant 0 : index
    %c0_0 = arith.constant 0 : index
    %c0_1 = arith.constant 0 : index
    %0 = vector.load %arg2[%c0, %c0_0, %c0_1] : memref<1x16x512xf32, #tpu.memory_space<vmem>>, vector<1x16x512xf32>
    %1 = vector.shape_cast %0 : vector<1x16x512xf32> to vector<16x512xf32>
    %c0_2 = arith.constant 0 : index
    %c0_3 = arith.constant 0 : index
    %2 = vector.load %arg3[%c0_2, %c0_3] : memref<1x512xf32, #tpu.memory_space<vmem>>, vector<1x512xf32>
    %3 = vector.broadcast %2 : vector<1x512xf32> to vector<16x512xf32>
    %4 = arith.mulf %1, %3 : vector<16x512xf32>
    %c0_4 = arith.constant 0 : index
    %c0_5 = arith.constant 0 : index
    %5 = vector.load %arg4[%c0_4, %c0_5] : memref<1x512xf32, #tpu.memory_space<vmem>>, vector<1x512xf32>
    %6 = vector.broadcast %5 : vector<1x512xf32> to vector<16x512xf32>
    %7 = arith.addf %4, %6 : vector<16x512xf32>
    %c0_6 = arith.constant 0 : index
    %c0_7 = arith.constant 0 : index
    %c0_8 = arith.constant 0 : index
    %8 = vector.load %arg5[%c0_6, %c0_7, %c0_8] : memref<1x16x512xf32, #tpu.memory_space<vmem>>, vector<1x16x512xf32>
    %9 = vector.shape_cast %8 : vector<1x16x512xf32> to vector<16x512xf32>
    %10 = arith.addf %7, %9 : vector<16x512xf32>
    %cst = arith.constant 0.000000e+00 : f32
    %11 = vector.broadcast %cst : f32 to vector<16x512xf32>
    %12 = arith.cmpf ogt, %10, %11 : vector<16x512xf32>
    %13 = math.exp %10 : vector<16x512xf32>
    %cst_9 = arith.constant 1.000000e+00 : f32
    %14 = vector.broadcast %cst_9 : f32 to vector<16x512xf32>
    %15 = arith.subf %13, %14 : vector<16x512xf32>
    %cst_10 = arith.constant 1.67326319 : f32
    %16 = vector.broadcast %cst_10 : f32 to vector<16x512xf32>
    %17 = arith.mulf %16, %15 : vector<16x512xf32>
    %18 = arith.select %12, %10, %17 : vector<16x512xi1>, vector<16x512xf32>
    %cst_11 = arith.constant 1.05070102 : f32
    %19 = vector.broadcast %cst_11 : f32 to vector<16x512xf32>
    %20 = arith.mulf %19, %18 : vector<16x512xf32>
    %c0_12 = arith.constant 0 : index
    %c0_13 = arith.constant 0 : index
    %c0_14 = arith.constant 0 : index
    %21 = vector.load %arg6[%c0_12, %c0_13, %c0_14] : memref<1x16x512xf32, #tpu.memory_space<vmem>>, vector<1x16x512xf32>
    %22 = vector.shape_cast %21 : vector<1x16x512xf32> to vector<16x512xf32>
    %23 = vector.shape_cast %20 : vector<16x512xf32> to vector<1x16x512xf32>
    tpu.vector_store %arg6[%c0_12, %c0_13, %c0_14], %23 {strides = array<i32>} : memref<1x16x512xf32, #tpu.memory_space<vmem>>, vector<1x16x512xf32>,
    return
  }
  func.func @transform_0(%arg0: i32, %arg1: i32) -> (i32, i32, i32) {
    %c0_i32 = arith.constant 0 : i32
    %c0_i32_0 = arith.constant 0 : i32
    return %arg0, %arg1, %c0_i32 : i32, i32, i32
  }
  func.func @transform_1(%arg0: i32, %arg1: i32) -> (i32, i32) {
    %c0_i32 = arith.constant 0 : i32
    %c0_i32_0 = arith.constant 0 : i32
    %c0_i32_1 = arith.constant 0 : i32
    return %c0_i32, %c0_i32_0 : i32, i32
  }
  func.func @transform_2(%arg0: i32, %arg1: i32) -> (i32, i32) {
    %c0_i32 = arith.constant 0 : i32
    %c0_i32_0 = arith.constant 0 : i32
    %c0_i32_1 = arith.constant 0 : i32
    return %c0_i32, %c0_i32_0 : i32, i32
  }
  func.func @transform_3(%arg0: i32, %arg1: i32) -> (i32, i32, i32) {
    %c0_i32 = arith.constant 0 : i32
    %c0_i32_0 = arith.constant 0 : i32
    return %arg0, %arg1, %c0_i32 : i32, i32, i32
  }
  func.func @transform_4(%arg0: i32, %arg1: i32) -> (i32, i32, i32) {
    %c0_i32 = arith.constant 0 : i32
    %c0_i32_0 = arith.constant 0 : i32
    return %arg0, %arg1, %c0_i32 : i32, i32, i32
  }
}

</mosaic_0001>

<llo_original>
// kernel: tile.23
$region0: #{tile.23}
  #allocation0 [shape = 's32[1]{0}', space=sflag, size = 0x4, scoped, tag = 'scoped memory for tile.23']
  %s0 = inlined_call_operand.vmem [shape: f32[32], index: 0, kind: input, shape index: {}]
  %s1 = inlined_call_operand.vmem [shape: f32[16,32], index: 1, kind: output, shape index: {}]
  // Predicated region
  $region2: #{tile.23} parent=0 // pred_check
    _
  $region3: #{tile.23} parent=0 // pred_check_branch
    %3 = sbr.rel (0) target = $region5
  $region4: #{tile.23} parent=0 // pred_region
    _
  $region5: #{tile.23} parent=0 // pred_fallthru
    _
  %v4 = vld [vmem:[%s0] ss:$0 sm:$0xff]
  %5 = vst [vmem:[%s1] sm:$0xff] %v4
  %s6 = scalar_lea.vmem %s1, 8
  %7 = vst [vmem:[%s6] sm:$0xff] %v4

// kernel: tile.24
$region0: #{tile.24}
  %s0 = inlined_call_operand.vmem [shape: f32[16,32], index: 0, kind: input, shape index: {}]
  %s1 = inlined_call_operand.vmem [shape: f32[1,512], index: 1, kind: output, shape index: {}]
  $region1: #{tile.24} parent=0
    #allocation0 [shape = 'u8[16384]{0}', space=vmem, size = 0x4000, scoped, tag = 'scoped mem for output reshape']
    %v2 = vld [vmem:[%s0] ss:$4 sm:$0xf]
    %vm3 = vcmask 261120
    %4 = vst.msk [vmem:[#allocation0] ss:$8 sm:$0xf] %vm3, %v2
    %s5 = scalar_lea.vmem %s0, 3
    %v6 = vld [vmem:[%s5] ss:$4 sm:$0xf]
    %7 = vrot.lane.b32.xlu0 %v6, 96
    %v8 = vpop.permute.xlu0 %7
    %vm9 = vcmask 1048320
    %10 = vst.msk [vmem:[#allocation0] ss:$8 sm:$0xf] %vm9, %v8
    %s11 = scalar_lea.vmem %s0, 2
    %v12 = vld [vmem:[%s11] ss:$4 sm:$0xf]
    %13 = vrot.lane.b32.xlu0 %v12, 64
    %v14 = vpop.permute.xlu0 %13
    %vm15 = vcmask 785920
    %16 = vst.msk [vmem:[#allocation0] ss:$8 sm:$0xf] %vm15, %v14
    %s17 = scalar_lea.vmem %s0, 1
    %v18 = vld [vmem:[%s17] ss:$4 sm:$0xf]
    %19 = vrot.lane.b32.xlu0 %v18, 32
    %v20 = vpop.permute.xlu0 %19
    %vm21 = vcmask 523520
    %22 = vst.msk [vmem:[#allocation0] ss:$8 sm:$0xf] %vm21, %v20
    %s24 = ssub.s32 2, 1
    %v25 = vld [vmem:[#allocation0] sm:%s24]
    %s27 = ssub.s32 2, 1
    %28 = vst [vmem:[%s1] sm:%s27] %v25
    %s29 = scalar_lea.vmem [#allocation0], 8
    %v30 = vld [vmem:[%s29] sm:%s24]
    %s32 = ssub.s32 2, 1
    %s33 = scalar_lea.vmem %s1, 1
    %34 = vst [vmem:[%s33] sm:%s32] %v30
    %s35 = scalar_lea.vmem [#allocation0], 16
    %v36 = vld [vmem:[%s35] sm:%s24]
    %s38 = ssub.s32 2, 1
    %s39 = scalar_lea.vmem %s1, 2
    %40 = vst [vmem:[%s39] sm:%s38] %v36
    %s41 = scalar_lea.vmem [#allocation0], 24
    %v42 = vld [vmem:[%s41] sm:%s24]
    %s44 = ssub.s32 2, 1
    %s45 = scalar_lea.vmem %s1, 3
    %46 = vst [vmem:[%s45] sm:%s44] %v42

// kernel: module_forward.5
$region0: #{module_forward.5}
  #allocation0 [shape = 'u32[]', space=smem, size = 0x4, offset = 0x4, fixed_abs, tag = 'smem constant byte address 0x4 - core index']
  #allocation1 [shape = 'u32[72,128]{1,0:T(1,128)}', space=vmem, size = 0x9000, scoped, tag = 'internal scratch']
  %s0 = inlined_call_operand.vmem [shape: f32[2,16,512], index: 0, kind: input, shape index: {}]
  %s1 = inlined_call_operand.vmem [shape: f32[1,512], index: 1, kind: input, shape index: {}]
  %s2 = inlined_call_operand.vmem [shape: f32[1,512], index: 2, kind: input, shape index: {}]
  %s3 = inlined_call_operand.vmem [shape: bf16[2,16,512], index: 3, kind: output, shape index: {}]
  %s4 = sld [smem:[#allocation0]]
  $region45: #{module_forward.5} parent=0
    _
  %s6 = ssub.s32 1, %s4
  %s7 = scalar_select 0, %s6, %s4
  loop: start=0, step=1, limit=4
  $region2: #{module_forward.5} parent=0 // loop_pre_header
    _
  $region3: #{module_forward.5} parent=0 // loop_header
    %s9 = sphi 0, %s13
    %p10 = scmp.ge.s32.totalorder %s9, 4
    %s16 = sphi 0, %s28
    %s17 = sphi 0, %s24
    %s18 = sphi 0, %s16
    %s19 = sphi 0, %s17
    %s20 = sphi 0, %s18
    %s21 = sphi 0, %s19
    %s33 = sphi 0, %s35
    %s36 = sphi 0, %s33
    %s37 = sphi 0, %s36
    %s53 = sphi 0, %s37
    %s57 = sphi 0, %s57
    %s59 = sphi 0, %s57
    %s60 = sphi 0, %s59
    %s74 = sphi 0, %s60
    %s78 = sphi 0, %s78
    %s80 = sphi 0, %s78
    %s81 = sphi 0, %s80
    %s95 = sphi 0, %s81
    %s103 = sphi 0, %s105
    %s106 = sphi 0, %s103
    %s107 = sphi 0, %s106
    %s123 = sphi 0, %s107
  $region4: #{module_forward.5} parent=0 // loop_header_branch
    %12 = sbr.rel (%p10) target = $region8
  $region5: #{module_forward.5} parent=0 // loop_body
    %s14 = ssub.s32 %s9, 1
    %s15 = ssub.s32 %s9, 2
    %s22 = sadd.s32 1, %s17
    %p23 = scmp.ge.s32.totalorder %s22, 1
    %s24 = scalar_select %p23, 0, %s22
    %s25 = sadd.s32 1, %s16
    %s26 = scalar_select %p23, %s25, %s16
    %p27 = scmp.ge.s32.totalorder %s26, 2
    %s28 = scalar_select %p27, 0, %s26
    %s29 = ssub.s32 %s16, %s28
    %s30 = ssub.s32 %s17, %s24
    %s31 = sor.u32 %s29, %s30
    %p32 = scmp.eq.s32.totalorder %s31, 0
    %s34 = sadd.s32 %s33, 1
    %s35 = scalar_select %p32, %s33, %s34
    %p38 = pneg %p32
    %p39 = scmp.eq.s32.totalorder %s9, 1
    %p40 = por %p38, %p39
    %p41 = scmp.ne.s32.totalorder %s33, %s36
    %p42 = scmp.eq.s32.totalorder %s9, 0
    %p43 = por %p41, %p42
    %p44 = scmp.ne.s32.totalorder %s33, %s36
    %p45 = scmp.eq.s32.totalorder %s14, 1
    %p46 = por %p44, %p45
    %p47 = scmp.ne.s32.totalorder %s36, %s37
    %p48 = scmp.eq.s32.totalorder %s14, 0
    %p49 = por %p47, %p48
    %p50 = scmp.ne.s32.totalorder %s36, %s37
    %p51 = scmp.eq.s32.totalorder %s15, 1
    %p52 = por %p50, %p51
    %p54 = scmp.ne.s32.totalorder %s37, %s53
    %p55 = scmp.eq.s32.totalorder %s15, 0
    %p56 = por %p54, %p55
    %s58 = sadd.s32 %s57, 1
    %p61 = scmp.eq.s32.totalorder %s9, 1
    %p62 = scmp.ne.s32.totalorder %s57, %s59
    %p63 = scmp.eq.s32.totalorder %s9, 0
    %p64 = por %p62, %p63
    %p65 = scmp.ne.s32.totalorder %s57, %s59
    %p66 = scmp.eq.s32.totalorder %s14, 1
    %p67 = por %p65, %p66
    %p68 = scmp.ne.s32.totalorder %s59, %s60
    %p69 = scmp.eq.s32.totalorder %s14, 0
    %p70 = por %p68, %p69
    %p71 = scmp.ne.s32.totalorder %s59, %s60
    %p72 = scmp.eq.s32.totalorder %s15, 1
    %p73 = por %p71, %p72
    %p75 = scmp.ne.s32.totalorder %s60, %s74
    %p76 = scmp.eq.s32.totalorder %s15, 0
    %p77 = por %p75, %p76
    %s79 = sadd.s32 %s78, 1
    %p82 = scmp.eq.s32.totalorder %s9, 1
    %p83 = scmp.ne.s32.totalorder %s78, %s80
    %p84 = scmp.eq.s32.totalorder %s9, 0
    %p85 = por %p83, %p84
    %p86 = scmp.ne.s32.totalorder %s78, %s80
    %p87 = scmp.eq.s32.totalorder %s14, 1
    %p88 = por %p86, %p87
    %p89 = scmp.ne.s32.totalorder %s80, %s81
    %p90 = scmp.eq.s32.totalorder %s14, 0
    %p91 = por %p89, %p90
    %p92 = scmp.ne.s32.totalorder %s80, %s81
    %p93 = scmp.eq.s32.totalorder %s15, 1
    %p94 = por %p92, %p93
    %p96 = scmp.ne.s32.totalorder %s81, %s95
    %p97 = scmp.eq.s32.totalorder %s15, 0
    %p98 = por %p96, %p97
    %s99 = ssub.s32 %s16, %s28
    %s100 = ssub.s32 %s17, %s24
    %s101 = sor.u32 %s99, %s100
    %p102 = scmp.eq.s32.totalorder %s101, 0
    %s104 = sadd.s32 %s103, 1
    %s105 = scalar_select %p102, %s103, %s104
    %p108 = pneg %p102
    %p109 = scmp.eq.s32.totalorder %s9, 1
    %p110 = por %p108, %p109
    %p111 = scmp.ne.s32.totalorder %s103, %s106
    %p112 = scmp.eq.s32.totalorder %s9, 0
    %p113 = por %p111, %p112
    %p114 = scmp.ne.s32.totalorder %s103, %s106
    %p115 = scmp.eq.s32.totalorder %s14, 1
    %p116 = por %p114, %p115
    %p117 = scmp.ne.s32.totalorder %s106, %s107
    %p118 = scmp.eq.s32.totalorder %s14, 0
    %p119 = por %p117, %p118
    %p120 = scmp.ne.s32.totalorder %s106, %s107
    %p121 = scmp.eq.s32.totalorder %s15, 1
    %p122 = por %p120, %p121
    %p124 = scmp.ne.s32.totalorder %s107, %s123
    %p125 = scmp.eq.s32.totalorder %s15, 0
    %p126 = por %p124, %p125
    %p127 = scmp.le.s32.totalorder 1, %s9
    %p128 = scmp.lt.s32.totalorder %s9, 3
    %p129 = pnand %p127, %p128
    %p130 = pneg %p129
    // Predicated region
    $region9: #{module_forward.5} parent=5 // pred_check
      _
    $region10: #{module_forward.5} parent=5 // pred_check_branch
      %132 = sbr.rel (%p129) target = $region12
    $region11: #{module_forward.5} parent=5 // pred_region
      %s133 = ssub.s32 %s9, 1
      // Predicated region
      $region13: #{module_forward.5} parent=11 // pred_check
        %p134 = pneg %p70
      $region14: #{module_forward.5} parent=11 // pred_check_branch
        %136 = sbr.rel (%p134) target = $region16
      $region15: #{module_forward.5} parent=11 // pred_region
        _
      $region16: #{module_forward.5} parent=11 // pred_fallthru
        _
      // Predicated region
      $region17: #{module_forward.5} parent=11 // pred_check
        %p137 = pneg %p91
      $region18: #{module_forward.5} parent=11 // pred_check_branch
        %139 = sbr.rel (%p137) target = $region20
      $region19: #{module_forward.5} parent=11 // pred_region
        _
      $region20: #{module_forward.5} parent=11 // pred_fallthru
        _
    $region12: #{module_forward.5} parent=5 // pred_fallthru
      _
    %p140 = scmp.lt.s32.totalorder %s9, 2
    // Predicated region
    $region21: #{module_forward.5} parent=5 // pred_check
      %p141 = pneg %p140
    $region22: #{module_forward.5} parent=5 // pred_check_branch
      %143 = sbr.rel (%p141) target = $region24
    $region23: #{module_forward.5} parent=5 // pred_region
      // Predicated region
      $region25: #{module_forward.5} parent=23 // pred_check
        %p144 = pneg %p43
      $region26: #{module_forward.5} parent=23 // pred_check_branch
        %146 = sbr.rel (%p144) target = $region28
      $region27: #{module_forward.5} parent=23 // pred_region
        %s147 = smul.u32 2, %s17
        %p148 = scmp.lt.s32.totalorder %s16, 1
        %s149 = scalar_select %p148, %s16, 1
        %p150 = scmp.lt.s32.totalorder %s147, 1
        %s151 = scalar_select %p150, %s147, 1
        %s152 = smul.addr %s151, 4
        %s153 = smul.addr %s149, 8
        %s154 = sadd.s32 %s152, %s153
        %s155 = smul.addr %s154, 8
        %s156 = scalar_lea.vmem %s0, %s155
        %s157 = smul.u32 2, %s17
      $region28: #{module_forward.5} parent=23 // pred_fallthru
        _
    $region24: #{module_forward.5} parent=5 // pred_fallthru
      _
    %p158 = scmp.le.s32.totalorder 1, %s9
    %p159 = scmp.lt.s32.totalorder %s9, 3
    %p160 = pnand %p158, %p159
    %p161 = pneg %p160
    // Predicated region
    $region29: #{module_forward.5} parent=5 // pred_check
      _
    $region30: #{module_forward.5} parent=5 // pred_check_branch
      %163 = sbr.rel (%p160) target = $region32
    $region31: #{module_forward.5} parent=5 // pred_region
      %s164 = ssub.s32 %s9, 1
      %s165 = smul.u32 2, %s19
      %p166 = scmp.lt.s32.totalorder %s18, 1
      %s167 = scalar_select %p166, %s18, 1
      %p168 = scmp.lt.s32.totalorder %s165, 1
      %s169 = scalar_select %p168, %s165, 1
      %s170 = smul.addr %s169, 4
      %s171 = smul.addr %s167, 8
      %s172 = sadd.s32 %s170, %s171
      %s173 = smul.addr %s172, 8
      %s174 = scalar_lea.vmem %s0, %s173
      %p175 = pneg %p49
      %p176 = pneg %p46
      %p177 = pneg %p70
      %p178 = pneg %p67
      %p179 = pneg %p91
      %p180 = pneg %p88
      %p181 = pneg %p119
      %p182 = pneg %p116
      %s183 = smul.u32 2, %s19
      %p184 = scmp.lt.s32.totalorder %s18, 1
      %s185 = scalar_select %p184, %s18, 1
      %p186 = scmp.lt.s32.totalorder %s183, 1
      %s187 = scalar_select %p186, %s183, 1
      %s188 = smul.addr %s187, 4
      %s189 = smul.addr %s185, 8
      %s190 = sadd.s32 %s188, %s189
      %s191 = smul.addr %s190, 4
      %s192 = scalar_lea.vmem %s3, %s191
      %s193 = smul.u32 2, %s19
      %p194 = scmp.lt.s32.totalorder %s18, 1
      %s195 = scalar_select %p194, %s18, 1
      %p196 = scmp.lt.s32.totalorder %s193, 1
      %s197 = scalar_select %p196, %s193, 1
      %s198 = smul.addr %s197, 4
      %s199 = smul.addr %s195, 8
      %s200 = sadd.s32 %s198, %s199
      %s201 = smul.addr %s200, 8
      %s202 = scalar_lea.vmem %s0, %s201
      %s203 = smul.u32 2, %s19
      %s204 = smul.u32 2, %s19
      %p205 = scmp.lt.s32.totalorder %s18, 1
      %s206 = scalar_select %p205, %s18, 1
      %p207 = scmp.lt.s32.totalorder %s204, 1
      %s208 = scalar_select %p207, %s204, 1
      %s209 = smul.addr %s208, 4
      %s210 = smul.addr %s206, 8
      %s211 = sadd.s32 %s209, %s210
      %s212 = smul.addr %s211, 4
      %s213 = scalar_lea.vmem %s3, %s212
      %s214 = smul.u32 2, %s19
      %v215 = vld [vmem:[%s202] sm:$0xff]
      %v216 = vld [vmem:[%s202 + $0x8] sm:$0xff]
      %v217 = vld [vmem:[%s202 + $0x10] sm:$0xff]
      %v218 = vld [vmem:[%s202 + $0x18] sm:$0xff]
      %v219 = vld [vmem:[%s202 + $0x20] sm:$0xff]
      %v220 = vld [vmem:[%s202 + $0x28] sm:$0xff]
      %v221 = vld [vmem:[%s202 + $0x30] sm:$0xff]
      %v222 = vld [vmem:[%s202 + $0x38] sm:$0xff]
      %v223 = vld [vmem:[%s1] sm:$0xf]
      %v225 = vperm.slane %v223, 0
      %v226 = vperm.slane %v223, 1
      %v227 = vperm.slane %v223, 2
      %v228 = vperm.slane %v223, 3
      %v233 = vmul.f32 %v215, %v225
      %v234 = vmul.f32 %v216, %v226
      %v235 = vmul.f32 %v217, %v227
      %v236 = vmul.f32 %v218, %v228
      %v237 = vmul.f32 %v219, %v225
      %v238 = vmul.f32 %v220, %v226
      %v239 = vmul.f32 %v221, %v227
      %v240 = vmul.f32 %v222, %v228
      %v241 = vld [vmem:[%s2] sm:$0xf]
      %v243 = vperm.slane %v241, 0
      %v244 = vperm.slane %v241, 1
      %v245 = vperm.slane %v241, 2
      %v246 = vperm.slane %v241, 3
      %v251 = vadd.f32 %v233, %v243
      %v252 = vadd.f32 %v234, %v244
      %v253 = vadd.f32 %v235, %v245
      %v254 = vadd.f32 %v236, %v246
      %v255 = vadd.f32 %v237, %v243
      %v256 = vadd.f32 %v238, %v244
      %v257 = vadd.f32 %v239, %v245
      %v258 = vadd.f32 %v240, %v246
      %vm259 = vcmp.gt.f32.partialorder %v251, 0.0
      %vm260 = vcmp.gt.f32.partialorder %v252, 0.0
      %vm261 = vcmp.gt.f32.partialorder %v253, 0.0
      %vm262 = vcmp.gt.f32.partialorder %v254, 0.0
      %vm263 = vcmp.gt.f32.partialorder %v255, 0.0
      %vm264 = vcmp.gt.f32.partialorder %v256, 0.0
      %vm265 = vcmp.gt.f32.partialorder %v257, 0.0
      %vm266 = vcmp.gt.f32.partialorder %v258, 0.0
      %v267 = vmul.f32 %v251, 1.442695
      %v268 = vpow.pop %v267
      %v269 = vmul.f32 %v252, 1.442695
      %v270 = vpow.pop %v269
      %v271 = vmul.f32 %v253, 1.442695
      %v272 = vpow.pop %v271
      %v273 = vmul.f32 %v254, 1.442695
      %v274 = vpow.pop %v273
      %v275 = vmul.f32 %v255, 1.442695
      %v276 = vpow.pop %v275
      %v277 = vmul.f32 %v256, 1.442695
      %v278 = vpow.pop %v277
      %v279 = vmul.f32 %v257, 1.442695
      %v280 = vpow.pop %v279
      %v281 = vmul.f32 %v258, 1.442695
      %v282 = vpow.pop %v281
      %v283 = vsub.f32 %v268, 1.0
      %v284 = vsub.f32 %v270, 1.0
      %v285 = vsub.f32 %v272, 1.0
      %v286 = vsub.f32 %v274, 1.0
      %v287 = vsub.f32 %v276, 1.0
      %v288 = vsub.f32 %v278, 1.0
      %v289 = vsub.f32 %v280, 1.0
      %v290 = vsub.f32 %v282, 1.0
      %v291 = vmul.f32 %v283, 1.6732632
      %v292 = vmul.f32 %v284, 1.6732632
      %v293 = vmul.f32 %v285, 1.6732632
      %v294 = vmul.f32 %v286, 1.6732632
      %v295 = vmul.f32 %v287, 1.6732632
      %v296 = vmul.f32 %v288, 1.6732632
      %v297 = vmul.f32 %v289, 1.6732632
      %v298 = vmul.f32 %v290, 1.6732632
      %v299 = vsel %vm259, %v251, %v291
      %v300 = vsel %vm260, %v252, %v292
      %v301 = vsel %vm261, %v253, %v293
      %v302 = vsel %vm262, %v254, %v294
      %v303 = vsel %vm263, %v255, %v295
      %v304 = vsel %vm264, %v256, %v296
      %v305 = vsel %vm265, %v257, %v297
      %v306 = vsel %vm266, %v258, %v298
      %v307 = vmul.f32 %v299, 1.050701
      %v308 = vmul.f32 %v300, 1.050701
      %v309 = vmul.f32 %v301, 1.050701
      %v310 = vmul.f32 %v302, 1.050701
      %v311 = vmul.f32 %v303, 1.050701
      %v312 = vmul.f32 %v304, 1.050701
      %v313 = vmul.f32 %v305, 1.050701
      %v314 = vmul.f32 %v306, 1.050701
      %v315 = vpack.c.bf16 %v308, %v307
      %v316 = vpack.c.bf16 %v310, %v309
      %v317 = vpack.c.bf16 %v312, %v311
      %v318 = vpack.c.bf16 %v314, %v313
      %319 = vst [vmem:[%s213] sm:$0xff] %v315
      %320 = vst [vmem:[%s213 + $0x8] sm:$0xff] %v316
      %321 = vst [vmem:[%s213 + $0x10] sm:$0xff] %v317
      %322 = vst [vmem:[%s213 + $0x18] sm:$0xff] %v318
      %s323 = smul.u32 2, %s19
      %p324 = scmp.lt.s32.totalorder %s18, 1
      %s325 = scalar_select %p324, %s18, 1
      %p326 = scmp.lt.s32.totalorder %s323, 1
      %s327 = scalar_select %p326, %s323, 1
      %s328 = smul.addr %s327, 4
      %s329 = smul.addr %s325, 8
      %s330 = sadd.s32 %s328, %s329
      %s331 = smul.addr %s330, 4
      %s332 = scalar_lea.vmem %s3, %s331
      // Predicated region
      $region33: #{module_forward.5} parent=31 // pred_check
        %p333 = pneg %p116
      $region34: #{module_forward.5} parent=31 // pred_check_branch
        %335 = sbr.rel (%p333) target = $region36
      $region35: #{module_forward.5} parent=31 // pred_region
        %s336 = smul.u32 2, %s19
      $region36: #{module_forward.5} parent=31 // pred_fallthru
        _
    $region32: #{module_forward.5} parent=5 // pred_fallthru
      _
    %p337 = scmp.le.s32.totalorder 2, %s9
    // Predicated region
    $region37: #{module_forward.5} parent=5 // pred_check
      %p338 = pneg %p337
    $region38: #{module_forward.5} parent=5 // pred_check_branch
      %340 = sbr.rel (%p338) target = $region40
    $region39: #{module_forward.5} parent=5 // pred_region
      %s341 = ssub.s32 %s9, 2
      // Predicated region
      $region41: #{module_forward.5} parent=39 // pred_check
        %p342 = pneg %p122
      $region42: #{module_forward.5} parent=39 // pred_check_branch
        %344 = sbr.rel (%p342) target = $region44
      $region43: #{module_forward.5} parent=39 // pred_region
        %s345 = smul.u32 2, %s21
        %p346 = scmp.lt.s32.totalorder %s20, 1
        %s347 = scalar_select %p346, %s20, 1
        %p348 = scmp.lt.s32.totalorder %s345, 1
        %s349 = scalar_select %p348, %s345, 1
        %s350 = smul.addr %s349, 4
        %s351 = smul.addr %s347, 8
        %s352 = sadd.s32 %s350, %s351
        %s353 = smul.addr %s352, 4
        %s354 = scalar_lea.vmem %s3, %s353
      $region44: #{module_forward.5} parent=39 // pred_fallthru
        _
    $region40: #{module_forward.5} parent=5 // pred_fallthru
      _
  $region6: #{module_forward.5} parent=0 // loop_footer
    %s13 = sadd.s32 1, %s9
  $region7: #{module_forward.5} parent=0 // loop_footer_branch
    %8 = sbr.rel target = $region3
  $region8: #{module_forward.5} parent=0 // loop_exit
    _

// kernel: module_forward.7
$region0: #{module_forward.7}
  #allocation0 [shape = 'u32[]', space=smem, size = 0x4, offset = 0x4, fixed_abs, tag = 'smem constant byte address 0x4 - core index']
  #allocation1 [shape = 'u32[72,128]{1,0:T(1,128)}', space=vmem, size = 0x9000, scoped, tag = 'internal scratch']
  %s0 = inlined_call_operand.vmem [shape: f32[2,16,512], index: 0, kind: input, shape index: {}]
  %s1 = inlined_call_operand.vmem [shape: f32[1,512], index: 1, kind: input, shape index: {}]
  %s2 = inlined_call_operand.vmem [shape: f32[1,512], index: 2, kind: input, shape index: {}]
  %s3 = inlined_call_operand.vmem [shape: f32[2,16,512], index: 3, kind: input, shape index: {}]
  %s4 = inlined_call_operand.vmem [shape: f32[2,16,512], index: 4, kind: output, shape index: {}]
  %s5 = sld [smem:[#allocation0]]
  $region49: #{module_forward.7} parent=0
    _
  %s7 = ssub.s32 1, %s5
  %s8 = scalar_select 0, %s7, %s5
  loop: start=0, step=1, limit=4
  $region2: #{module_forward.7} parent=0 // loop_pre_header
    _
  $region3: #{module_forward.7} parent=0 // loop_header
    %s10 = sphi 0, %s14
    %p11 = scmp.ge.s32.totalorder %s10, 4
    %s17 = sphi 0, %s29
    %s18 = sphi 0, %s25
    %s19 = sphi 0, %s17
    %s20 = sphi 0, %s18
    %s21 = sphi 0, %s19
    %s22 = sphi 0, %s20
    %s34 = sphi 0, %s36
    %s37 = sphi 0, %s34
    %s38 = sphi 0, %s37
    %s54 = sphi 0, %s38
    %s58 = sphi 0, %s58
    %s60 = sphi 0, %s58
    %s61 = sphi 0, %s60
    %s75 = sphi 0, %s61
    %s79 = sphi 0, %s79
    %s81 = sphi 0, %s79
    %s82 = sphi 0, %s81
    %s96 = sphi 0, %s82
    %s104 = sphi 0, %s106
    %s107 = sphi 0, %s104
    %s108 = sphi 0, %s107
    %s124 = sphi 0, %s108
    %s132 = sphi 0, %s134
    %s135 = sphi 0, %s132
    %s136 = sphi 0, %s135
    %s152 = sphi 0, %s136
  $region4: #{module_forward.7} parent=0 // loop_header_branch
    %13 = sbr.rel (%p11) target = $region8
  $region5: #{module_forward.7} parent=0 // loop_body
    %s15 = ssub.s32 %s10, 1
    %s16 = ssub.s32 %s10, 2
    %s23 = sadd.s32 1, %s18
    %p24 = scmp.ge.s32.totalorder %s23, 1
    %s25 = scalar_select %p24, 0, %s23
    %s26 = sadd.s32 1, %s17
    %s27 = scalar_select %p24, %s26, %s17
    %p28 = scmp.ge.s32.totalorder %s27, 2
    %s29 = scalar_select %p28, 0, %s27
    %s30 = ssub.s32 %s17, %s29
    %s31 = ssub.s32 %s18, %s25
    %s32 = sor.u32 %s30, %s31
    %p33 = scmp.eq.s32.totalorder %s32, 0
    %s35 = sadd.s32 %s34, 1
    %s36 = scalar_select %p33, %s34, %s35
    %p39 = pneg %p33
    %p40 = scmp.eq.s32.totalorder %s10, 1
    %p41 = por %p39, %p40
    %p42 = scmp.ne.s32.totalorder %s34, %s37
    %p43 = scmp.eq.s32.totalorder %s10, 0
    %p44 = por %p42, %p43
    %p45 = scmp.ne.s32.totalorder %s34, %s37
    %p46 = scmp.eq.s32.totalorder %s15, 1
    %p47 = por %p45, %p46
    %p48 = scmp.ne.s32.totalorder %s37, %s38
    %p49 = scmp.eq.s32.totalorder %s15, 0
    %p50 = por %p48, %p49
    %p51 = scmp.ne.s32.totalorder %s37, %s38
    %p52 = scmp.eq.s32.totalorder %s16, 1
    %p53 = por %p51, %p52
    %p55 = scmp.ne.s32.totalorder %s38, %s54
    %p56 = scmp.eq.s32.totalorder %s16, 0
    %p57 = por %p55, %p56
    %s59 = sadd.s32 %s58, 1
    %p62 = scmp.eq.s32.totalorder %s10, 1
    %p63 = scmp.ne.s32.totalorder %s58, %s60
    %p64 = scmp.eq.s32.totalorder %s10, 0
    %p65 = por %p63, %p64
    %p66 = scmp.ne.s32.totalorder %s58, %s60
    %p67 = scmp.eq.s32.totalorder %s15, 1
    %p68 = por %p66, %p67
    %p69 = scmp.ne.s32.totalorder %s60, %s61
    %p70 = scmp.eq.s32.totalorder %s15, 0
    %p71 = por %p69, %p70
    %p72 = scmp.ne.s32.totalorder %s60, %s61
    %p73 = scmp.eq.s32.totalorder %s16, 1
    %p74 = por %p72, %p73
    %p76 = scmp.ne.s32.totalorder %s61, %s75
    %p77 = scmp.eq.s32.totalorder %s16, 0
    %p78 = por %p76, %p77
    %s80 = sadd.s32 %s79, 1
    %p83 = scmp.eq.s32.totalorder %s10, 1
    %p84 = scmp.ne.s32.totalorder %s79, %s81
    %p85 = scmp.eq.s32.totalorder %s10, 0
    %p86 = por %p84, %p85
    %p87 = scmp.ne.s32.totalorder %s79, %s81
    %p88 = scmp.eq.s32.totalorder %s15, 1
    %p89 = por %p87, %p88
    %p90 = scmp.ne.s32.totalorder %s81, %s82
    %p91 = scmp.eq.s32.totalorder %s15, 0
    %p92 = por %p90, %p91
    %p93 = scmp.ne.s32.totalorder %s81, %s82
    %p94 = scmp.eq.s32.totalorder %s16, 1
    %p95 = por %p93, %p94
    %p97 = scmp.ne.s32.totalorder %s82, %s96
    %p98 = scmp.eq.s32.totalorder %s16, 0
    %p99 = por %p97, %p98
    %s100 = ssub.s32 %s17, %s29
    %s101 = ssub.s32 %s18, %s25
    %s102 = sor.u32 %s100, %s101
    %p103 = scmp.eq.s32.totalorder %s102, 0
    %s105 = sadd.s32 %s104, 1
    %s106 = scalar_select %p103, %s104, %s105
    %p109 = pneg %p103
    %p110 = scmp.eq.s32.totalorder %s10, 1
    %p111 = por %p109, %p110
    %p112 = scmp.ne.s32.totalorder %s104, %s107
    %p113 = scmp.eq.s32.totalorder %s10, 0
    %p114 = por %p112, %p113
    %p115 = scmp.ne.s32.totalorder %s104, %s107
    %p116 = scmp.eq.s32.totalorder %s15, 1
    %p117 = por %p115, %p116
    %p118 = scmp.ne.s32.totalorder %s107, %s108
    %p119 = scmp.eq.s32.totalorder %s15, 0
    %p120 = por %p118, %p119
    %p121 = scmp.ne.s32.totalorder %s107, %s108
    %p122 = scmp.eq.s32.totalorder %s16, 1
    %p123 = por %p121, %p122
    %p125 = scmp.ne.s32.totalorder %s108, %s124
    %p126 = scmp.eq.s32.totalorder %s16, 0
    %p127 = por %p125, %p126
    %s128 = ssub.s32 %s17, %s29
    %s129 = ssub.s32 %s18, %s25
    %s130 = sor.u32 %s128, %s129
    %p131 = scmp.eq.s32.totalorder %s130, 0
    %s133 = sadd.s32 %s132, 1
    %s134 = scalar_select %p131, %s132, %s133
    %p137 = pneg %p131
    %p138 = scmp.eq.s32.totalorder %s10, 1
    %p139 = por %p137, %p138
    %p140 = scmp.ne.s32.totalorder %s132, %s135
    %p141 = scmp.eq.s32.totalorder %s10, 0
    %p142 = por %p140, %p141
    %p143 = scmp.ne.s32.totalorder %s132, %s135
    %p144 = scmp.eq.s32.totalorder %s15, 1
    %p145 = por %p143, %p144
    %p146 = scmp.ne.s32.totalorder %s135, %s136
    %p147 = scmp.eq.s32.totalorder %s15, 0
    %p148 = por %p146, %p147
    %p149 = scmp.ne.s32.totalorder %s135, %s136
    %p150 = scmp.eq.s32.totalorder %s16, 1
    %p151 = por %p149, %p150
    %p153 = scmp.ne.s32.totalorder %s136, %s152
    %p154 = scmp.eq.s32.totalorder %s16, 0
    %p155 = por %p153, %p154
    %p156 = scmp.le.s32.totalorder 1, %s10
    %p157 = scmp.lt.s32.totalorder %s10, 3
    %p158 = pnand %p156, %p157
    %p159 = pneg %p158
    // Predicated region
    $region9: #{module_forward.7} parent=5 // pred_check
      _
    $region10: #{module_forward.7} parent=5 // pred_check_branch
      %161 = sbr.rel (%p158) target = $region12
    $region11: #{module_forward.7} parent=5 // pred_region
      %s162 = ssub.s32 %s10, 1
      // Predicated region
      $region13: #{module_forward.7} parent=11 // pred_check
        %p163 = pneg %p71
      $region14: #{module_forward.7} parent=11 // pred_check_branch
        %165 = sbr.rel (%p163) target = $region16
      $region15: #{module_forward.7} parent=11 // pred_region
        _
      $region16: #{module_forward.7} parent=11 // pred_fallthru
        _
      // Predicated region
      $region17: #{module_forward.7} parent=11 // pred_check
        %p166 = pneg %p92
      $region18: #{module_forward.7} parent=11 // pred_check_branch
        %168 = sbr.rel (%p166) target = $region20
      $region19: #{module_forward.7} parent=11 // pred_region
        _
      $region20: #{module_forward.7} parent=11 // pred_fallthru
        _
    $region12: #{module_forward.7} parent=5 // pred_fallthru
      _
    %p169 = scmp.lt.s32.totalorder %s10, 2
    // Predicated region
    $region21: #{module_forward.7} parent=5 // pred_check
      %p170 = pneg %p169
    $region22: #{module_forward.7} parent=5 // pred_check_branch
      %172 = sbr.rel (%p170) target = $region24
    $region23: #{module_forward.7} parent=5 // pred_region
      // Predicated region
      $region25: #{module_forward.7} parent=23 // pred_check
        %p173 = pneg %p44
      $region26: #{module_forward.7} parent=23 // pred_check_branch
        %175 = sbr.rel (%p173) target = $region28
      $region27: #{module_forward.7} parent=23 // pred_region
        %s176 = smul.u32 2, %s18
        %p177 = scmp.lt.s32.totalorder %s17, 1
        %s178 = scalar_select %p177, %s17, 1
        %p179 = scmp.lt.s32.totalorder %s176, 1
        %s180 = scalar_select %p179, %s176, 1
        %s181 = smul.addr %s180, 4
        %s182 = smul.addr %s178, 8
        %s183 = sadd.s32 %s181, %s182
        %s184 = smul.addr %s183, 8
        %s185 = scalar_lea.vmem %s0, %s184
        %s186 = smul.u32 2, %s18
      $region28: #{module_forward.7} parent=23 // pred_fallthru
        _
      // Predicated region
      $region29: #{module_forward.7} parent=23 // pred_check
        %p187 = pneg %p114
      $region30: #{module_forward.7} parent=23 // pred_check_branch
        %189 = sbr.rel (%p187) target = $region32
      $region31: #{module_forward.7} parent=23 // pred_region
        %s190 = smul.u32 2, %s18
        %p191 = scmp.lt.s32.totalorder %s17, 1
        %s192 = scalar_select %p191, %s17, 1
        %p193 = scmp.lt.s32.totalorder %s190, 1
        %s194 = scalar_select %p193, %s190, 1
        %s195 = smul.addr %s194, 4
        %s196 = smul.addr %s192, 8
        %s197 = sadd.s32 %s195, %s196
        %s198 = smul.addr %s197, 8
        %s199 = scalar_lea.vmem %s3, %s198
        %s200 = smul.u32 2, %s18
      $region32: #{module_forward.7} parent=23 // pred_fallthru
        _
    $region24: #{module_forward.7} parent=5 // pred_fallthru
      _
    %p201 = scmp.le.s32.totalorder 1, %s10
    %p202 = scmp.lt.s32.totalorder %s10, 3
    %p203 = pnand %p201, %p202
    %p204 = pneg %p203
    // Predicated region
    $region33: #{module_forward.7} parent=5 // pred_check
      _
    $region34: #{module_forward.7} parent=5 // pred_check_branch
      %206 = sbr.rel (%p203) target = $region36
    $region35: #{module_forward.7} parent=5 // pred_region
      %s207 = ssub.s32 %s10, 1
      %s208 = smul.u32 2, %s20
      %p209 = scmp.lt.s32.totalorder %s19, 1
      %s210 = scalar_select %p209, %s19, 1
      %p211 = scmp.lt.s32.totalorder %s208, 1
      %s212 = scalar_select %p211, %s208, 1
      %s213 = smul.addr %s212, 4
      %s214 = smul.addr %s210, 8
      %s215 = sadd.s32 %s213, %s214
      %s216 = smul.addr %s215, 8
      %s217 = scalar_lea.vmem %s0, %s216
      %p218 = pneg %p50
      %p219 = pneg %p47
      %p220 = pneg %p71
      %p221 = pneg %p68
      %p222 = pneg %p92
      %p223 = pneg %p89
      %s224 = smul.u32 2, %s20
      %p225 = scmp.lt.s32.totalorder %s19, 1
      %s226 = scalar_select %p225, %s19, 1
      %p227 = scmp.lt.s32.totalorder %s224, 1
      %s228 = scalar_select %p227, %s224, 1
      %s229 = smul.addr %s228, 4
      %s230 = smul.addr %s226, 8
      %s231 = sadd.s32 %s229, %s230
      %s232 = smul.addr %s231, 8
      %s233 = scalar_lea.vmem %s3, %s232
      %p234 = pneg %p120
      %p235 = pneg %p117
      %p236 = pneg %p148
      %p237 = pneg %p145
      %s238 = smul.u32 2, %s20
      %p239 = scmp.lt.s32.totalorder %s19, 1
      %s240 = scalar_select %p239, %s19, 1
      %p241 = scmp.lt.s32.totalorder %s238, 1
      %s242 = scalar_select %p241, %s238, 1
      %s243 = smul.addr %s242, 4
      %s244 = smul.addr %s240, 8
      %s245 = sadd.s32 %s243, %s244
      %s246 = smul.addr %s245, 8
      %s247 = scalar_lea.vmem %s4, %s246
      %s248 = smul.u32 2, %s20
      %p249 = scmp.lt.s32.totalorder %s19, 1
      %s250 = scalar_select %p249, %s19, 1
      %p251 = scmp.lt.s32.totalorder %s248, 1
      %s252 = scalar_select %p251, %s248, 1
      %s253 = smul.addr %s252, 4
      %s254 = smul.addr %s250, 8
      %s255 = sadd.s32 %s253, %s254
      %s256 = smul.addr %s255, 8
      %s257 = scalar_lea.vmem %s0, %s256
      %s258 = smul.u32 2, %s20
      %s259 = smul.u32 2, %s20
      %p260 = scmp.lt.s32.totalorder %s19, 1
      %s261 = scalar_select %p260, %s19, 1
      %p262 = scmp.lt.s32.totalorder %s259, 1
      %s263 = scalar_select %p262, %s259, 1
      %s264 = smul.addr %s263, 4
      %s265 = smul.addr %s261, 8
      %s266 = sadd.s32 %s264, %s265
      %s267 = smul.addr %s266, 8
      %s268 = scalar_lea.vmem %s3, %s267
      %s269 = smul.u32 2, %s20
      %s270 = smul.u32 2, %s20
      %p271 = scmp.lt.s32.totalorder %s19, 1
      %s272 = scalar_select %p271, %s19, 1
      %p273 = scmp.lt.s32.totalorder %s270, 1
      %s274 = scalar_select %p273, %s270, 1
      %s275 = smul.addr %s274, 4
      %s276 = smul.addr %s272, 8
      %s277 = sadd.s32 %s275, %s276
      %s278 = smul.addr %s277, 8
      %s279 = scalar_lea.vmem %s4, %s278
      %s280 = smul.u32 2, %s20
      %v281 = vld [vmem:[%s257] sm:$0xff]
      %v282 = vld [vmem:[%s257 + $0x8] sm:$0xff]
      %v283 = vld [vmem:[%s257 + $0x10] sm:$0xff]
      %v284 = vld [vmem:[%s257 + $0x18] sm:$0xff]
      %v285 = vld [vmem:[%s257 + $0x20] sm:$0xff]
      %v286 = vld [vmem:[%s257 + $0x28] sm:$0xff]
      %v287 = vld [vmem:[%s257 + $0x30] sm:$0xff]
      %v288 = vld [vmem:[%s257 + $0x38] sm:$0xff]
      %v289 = vld [vmem:[%s1] sm:$0xf]
      %v291 = vperm.slane %v289, 0
      %v292 = vperm.slane %v289, 1
      %v293 = vperm.slane %v289, 2
      %v294 = vperm.slane %v289, 3
      %v299 = vmul.f32 %v281, %v291
      %v300 = vmul.f32 %v282, %v292
      %v301 = vmul.f32 %v283, %v293
      %v302 = vmul.f32 %v284, %v294
      %v303 = vmul.f32 %v285, %v291
      %v304 = vmul.f32 %v286, %v292
      %v305 = vmul.f32 %v287, %v293
      %v306 = vmul.f32 %v288, %v294
      %v307 = vld [vmem:[%s2] sm:$0xf]
      %v309 = vperm.slane %v307, 0
      %v310 = vperm.slane %v307, 1
      %v311 = vperm.slane %v307, 2
      %v312 = vperm.slane %v307, 3
      %v317 = vadd.f32 %v299, %v309
      %v318 = vadd.f32 %v300, %v310
      %v319 = vadd.f32 %v301, %v311
      %v320 = vadd.f32 %v302, %v312
      %v321 = vadd.f32 %v303, %v309
      %v322 = vadd.f32 %v304, %v310
      %v323 = vadd.f32 %v305, %v311
      %v324 = vadd.f32 %v306, %v312
      %v325 = vld [vmem:[%s268] sm:$0xff]
      %v326 = vld [vmem:[%s268 + $0x8] sm:$0xff]
      %v327 = vld [vmem:[%s268 + $0x10] sm:$0xff]
      %v328 = vld [vmem:[%s268 + $0x18] sm:$0xff]
      %v329 = vld [vmem:[%s268 + $0x20] sm:$0xff]
      %v330 = vld [vmem:[%s268 + $0x28] sm:$0xff]
      %v331 = vld [vmem:[%s268 + $0x30] sm:$0xff]
      %v332 = vld [vmem:[%s268 + $0x38] sm:$0xff]
      %v333 = vadd.f32 %v317, %v325
      %v334 = vadd.f32 %v318, %v326
      %v335 = vadd.f32 %v319, %v327
      %v336 = vadd.f32 %v320, %v328
      %v337 = vadd.f32 %v321, %v329
      %v338 = vadd.f32 %v322, %v330
      %v339 = vadd.f32 %v323, %v331
      %v340 = vadd.f32 %v324, %v332
      %vm341 = vcmp.gt.f32.partialorder %v333, 0.0
      %vm342 = vcmp.gt.f32.partialorder %v334, 0.0
      %vm343 = vcmp.gt.f32.partialorder %v335, 0.0
      %vm344 = vcmp.gt.f32.partialorder %v336, 0.0
      %vm345 = vcmp.gt.f32.partialorder %v337, 0.0
      %vm346 = vcmp.gt.f32.partialorder %v338, 0.0
      %vm347 = vcmp.gt.f32.partialorder %v339, 0.0
      %vm348 = vcmp.gt.f32.partialorder %v340, 0.0
      %v349 = vmul.f32 %v333, 1.442695
      %v350 = vpow.pop %v349
      %v351 = vmul.f32 %v334, 1.442695
      %v352 = vpow.pop %v351
      %v353 = vmul.f32 %v335, 1.442695
      %v354 = vpow.pop %v353
      %v355 = vmul.f32 %v336, 1.442695
      %v356 = vpow.pop %v355
      %v357 = vmul.f32 %v337, 1.442695
      %v358 = vpow.pop %v357
      %v359 = vmul.f32 %v338, 1.442695
      %v360 = vpow.pop %v359
      %v361 = vmul.f32 %v339, 1.442695
      %v362 = vpow.pop %v361
      %v363 = vmul.f32 %v340, 1.442695
      %v364 = vpow.pop %v363
      %v365 = vsub.f32 %v350, 1.0
      %v366 = vsub.f32 %v352, 1.0
      %v367 = vsub.f32 %v354, 1.0
      %v368 = vsub.f32 %v356, 1.0
      %v369 = vsub.f32 %v358, 1.0
      %v370 = vsub.f32 %v360, 1.0
      %v371 = vsub.f32 %v362, 1.0
      %v372 = vsub.f32 %v364, 1.0
      %v373 = vmul.f32 %v365, 1.6732632
      %v374 = vmul.f32 %v366, 1.6732632
      %v375 = vmul.f32 %v367, 1.6732632
      %v376 = vmul.f32 %v368, 1.6732632
      %v377 = vmul.f32 %v369, 1.6732632
      %v378 = vmul.f32 %v370, 1.6732632
      %v379 = vmul.f32 %v371, 1.6732632
      %v380 = vmul.f32 %v372, 1.6732632
      %v381 = vsel %vm341, %v333, %v373
      %v382 = vsel %vm342, %v334, %v374
      %v383 = vsel %vm343, %v335, %v375
      %v384 = vsel %vm344, %v336, %v376
      %v385 = vsel %vm345, %v337, %v377
      %v386 = vsel %vm346, %v338, %v378
      %v387 = vsel %vm347, %v339, %v379
      %v388 = vsel %vm348, %v340, %v380
      %v389 = vmul.f32 %v381, 1.050701
      %v390 = vmul.f32 %v382, 1.050701
      %v391 = vmul.f32 %v383, 1.050701
      %v392 = vmul.f32 %v384, 1.050701
      %v393 = vmul.f32 %v385, 1.050701
      %v394 = vmul.f32 %v386, 1.050701
      %v395 = vmul.f32 %v387, 1.050701
      %v396 = vmul.f32 %v388, 1.050701
      %397 = vst [vmem:[%s279] sm:$0xff] %v389
      %398 = vst [vmem:[%s279 + $0x8] sm:$0xff] %v390
      %399 = vst [vmem:[%s279 + $0x10] sm:$0xff] %v391
      %400 = vst [vmem:[%s279 + $0x18] sm:$0xff] %v392
      %401 = vst [vmem:[%s279 + $0x20] sm:$0xff] %v393
      %402 = vst [vmem:[%s279 + $0x28] sm:$0xff] %v394
      %403 = vst [vmem:[%s279 + $0x30] sm:$0xff] %v395
      %404 = vst [vmem:[%s279 + $0x38] sm:$0xff] %v396
      %s405 = smul.u32 2, %s20
      %p406 = scmp.lt.s32.totalorder %s19, 1
      %s407 = scalar_select %p406, %s19, 1
      %p408 = scmp.lt.s32.totalorder %s405, 1
      %s409 = scalar_select %p408, %s405, 1
      %s410 = smul.addr %s409, 4
      %s411 = smul.addr %s407, 8
      %s412 = sadd.s32 %s410, %s411
      %s413 = smul.addr %s412, 8
      %s414 = scalar_lea.vmem %s4, %s413
      // Predicated region
      $region37: #{module_forward.7} parent=35 // pred_check
        %p415 = pneg %p145
      $region38: #{module_forward.7} parent=35 // pred_check_branch
        %417 = sbr.rel (%p415) target = $region40
      $region39: #{module_forward.7} parent=35 // pred_region
        %s418 = smul.u32 2, %s20
      $region40: #{module_forward.7} parent=35 // pred_fallthru
        _
    $region36: #{module_forward.7} parent=5 // pred_fallthru
      _
    %p419 = scmp.le.s32.totalorder 2, %s10
    // Predicated region
    $region41: #{module_forward.7} parent=5 // pred_check
      %p420 = pneg %p419
    $region42: #{module_forward.7} parent=5 // pred_check_branch
      %422 = sbr.rel (%p420) target = $region44
    $region43: #{module_forward.7} parent=5 // pred_region
      %s423 = ssub.s32 %s10, 2
      // Predicated region
      $region45: #{module_forward.7} parent=43 // pred_check
        %p424 = pneg %p151
      $region46: #{module_forward.7} parent=43 // pred_check_branch
        %426 = sbr.rel (%p424) target = $region48
      $region47: #{module_forward.7} parent=43 // pred_region
        %s427 = smul.u32 2, %s22
        %p428 = scmp.lt.s32.totalorder %s21, 1
        %s429 = scalar_select %p428, %s21, 1
        %p430 = scmp.lt.s32.totalorder %s427, 1
        %s431 = scalar_select %p430, %s427, 1
        %s432 = smul.addr %s431, 4
        %s433 = smul.addr %s429, 8
        %s434 = sadd.s32 %s432, %s433
        %s435 = smul.addr %s434, 8
        %s436 = scalar_lea.vmem %s4, %s435
      $region48: #{module_forward.7} parent=43 // pred_fallthru
        _
    $region44: #{module_forward.7} parent=5 // pred_fallthru
      _
  $region6: #{module_forward.7} parent=0 // loop_footer
    %s14 = sadd.s32 1, %s10
  $region7: #{module_forward.7} parent=0 // loop_footer_branch
    %9 = sbr.rel target = $region3
  $region8: #{module_forward.7} parent=0 // loop_exit
    _

// kernel: module_forward.4
$region0: #{module_forward.4}
  #allocation0 [shape = 'u32[]', space=smem, size = 0x4, offset = 0x4, fixed_abs, tag = 'smem constant byte address 0x4 - core index']
  #allocation1 [shape = 'u32[72,128]{1,0:T(1,128)}', space=vmem, size = 0x9000, scoped, tag = 'internal scratch']
  %s0 = inlined_call_operand.vmem [shape: bf16[2,18,18,32], index: 0, kind: input, shape index: {}]
  %s1 = inlined_call_operand.vmem [shape: bf16[288,32], index: 1, kind: input, shape index: {}]
  %s2 = inlined_call_operand.vmem [shape: f32[1,32], index: 2, kind: input, shape index: {}]
  %s3 = inlined_call_operand.vmem [shape: f32[2,256,32], index: 3, kind: output, shape index: {0}]
  %s4 = inlined_call_operand.vmem [shape: f32[2,2,32], index: 4, kind: output, shape index: {1}]
  %5 = xla_tuple %s3, %s4
  %s6 = sld [smem:[#allocation0]]
  $region53: #{module_forward.4} parent=0
    _
  %s8 = ssub.s32 1, %s6
  %s9 = scalar_select 0, %s8, %s6
  loop: start=0, step=1, limit=4
  $region2: #{module_forward.4} parent=0 // loop_pre_header
    _
  $region3: #{module_forward.4} parent=0 // loop_header
    %s11 = sphi 0, %s15
    %p12 = scmp.ge.s32.totalorder %s11, 4
    %s21 = sphi 0, %s23
    %s24 = sphi 0, %s21
    %s25 = sphi 0, %s24
    %s41 = sphi 0, %s25
    %s45 = sphi 0, %s45
    %s47 = sphi 0, %s45
    %s48 = sphi 0, %s47
    %s62 = sphi 0, %s48
    %s66 = sphi 0, %s66
    %s68 = sphi 0, %s66
    %s69 = sphi 0, %s68
    %s83 = sphi 0, %s69
    %s89 = sphi 0, %s91
    %s92 = sphi 0, %s89
    %s93 = sphi 0, %s92
    %s109 = sphi 0, %s93
    %s115 = sphi 0, %s117
    %s118 = sphi 0, %s115
    %s119 = sphi 0, %s118
    %s135 = sphi 0, %s119
  $region4: #{module_forward.4} parent=0 // loop_header_branch
    %14 = sbr.rel (%p12) target = $region8
  $region5: #{module_forward.4} parent=0 // loop_body
    %s16 = ssub.s32 %s11, 1
    %s17 = ssub.s32 %s11, 2
    %s18 = sadd.s32 %s11, 1
    %s19 = ssub.s32 %s11, %s18
    %p20 = scmp.eq.s32.totalorder %s19, 0
    %s22 = sadd.s32 %s21, 1
    %s23 = scalar_select %p20, %s21, %s22
    %p26 = pneg %p20
    %p27 = scmp.eq.s32.totalorder %s11, 1
    %p28 = por %p26, %p27
    %p29 = scmp.ne.s32.totalorder %s21, %s24
    %p30 = scmp.eq.s32.totalorder %s11, 0
    %p31 = por %p29, %p30
    %p32 = scmp.ne.s32.totalorder %s21, %s24
    %p33 = scmp.eq.s32.totalorder %s16, 1
    %p34 = por %p32, %p33
    %p35 = scmp.ne.s32.totalorder %s24, %s25
    %p36 = scmp.eq.s32.totalorder %s16, 0
    %p37 = por %p35, %p36
    %p38 = scmp.ne.s32.totalorder %s24, %s25
    %p39 = scmp.eq.s32.totalorder %s17, 1
    %p40 = por %p38, %p39
    %p42 = scmp.ne.s32.totalorder %s25, %s41
    %p43 = scmp.eq.s32.totalorder %s17, 0
    %p44 = por %p42, %p43
    %s46 = sadd.s32 %s45, 1
    %p49 = scmp.eq.s32.totalorder %s11, 1
    %p50 = scmp.ne.s32.totalorder %s45, %s47
    %p51 = scmp.eq.s32.totalorder %s11, 0
    %p52 = por %p50, %p51
    %p53 = scmp.ne.s32.totalorder %s45, %s47
    %p54 = scmp.eq.s32.totalorder %s16, 1
    %p55 = por %p53, %p54
    %p56 = scmp.ne.s32.totalorder %s47, %s48
    %p57 = scmp.eq.s32.totalorder %s16, 0
    %p58 = por %p56, %p57
    %p59 = scmp.ne.s32.totalorder %s47, %s48
    %p60 = scmp.eq.s32.totalorder %s17, 1
    %p61 = por %p59, %p60
    %p63 = scmp.ne.s32.totalorder %s48, %s62
    %p64 = scmp.eq.s32.totalorder %s17, 0
    %p65 = por %p63, %p64
    %s67 = sadd.s32 %s66, 1
    %p70 = scmp.eq.s32.totalorder %s11, 1
    %p71 = scmp.ne.s32.totalorder %s66, %s68
    %p72 = scmp.eq.s32.totalorder %s11, 0
    %p73 = por %p71, %p72
    %p74 = scmp.ne.s32.totalorder %s66, %s68
    %p75 = scmp.eq.s32.totalorder %s16, 1
    %p76 = por %p74, %p75
    %p77 = scmp.ne.s32.totalorder %s68, %s69
    %p78 = scmp.eq.s32.totalorder %s16, 0
    %p79 = por %p77, %p78
    %p80 = scmp.ne.s32.totalorder %s68, %s69
    %p81 = scmp.eq.s32.totalorder %s17, 1
    %p82 = por %p80, %p81
    %p84 = scmp.ne.s32.totalorder %s69, %s83
    %p85 = scmp.eq.s32.totalorder %s17, 0
    %p86 = por %p84, %p85
    %s87 = ssub.s32 %s11, %s18
    %p88 = scmp.eq.s32.totalorder %s87, 0
    %s90 = sadd.s32 %s89, 1
    %s91 = scalar_select %p88, %s89, %s90
    %p94 = pneg %p88
    %p95 = scmp.eq.s32.totalorder %s11, 1
    %p96 = por %p94, %p95
    %p97 = scmp.ne.s32.totalorder %s89, %s92
    %p98 = scmp.eq.s32.totalorder %s11, 0
    %p99 = por %p97, %p98
    %p100 = scmp.ne.s32.totalorder %s89, %s92
    %p101 = scmp.eq.s32.totalorder %s16, 1
    %p102 = por %p100, %p101
    %p103 = scmp.ne.s32.totalorder %s92, %s93
    %p104 = scmp.eq.s32.totalorder %s16, 0
    %p105 = por %p103, %p104
    %p106 = scmp.ne.s32.totalorder %s92, %s93
    %p107 = scmp.eq.s32.totalorder %s17, 1
    %p108 = por %p106, %p107
    %p110 = scmp.ne.s32.totalorder %s93, %s109
    %p111 = scmp.eq.s32.totalorder %s17, 0
    %p112 = por %p110, %p111
    %s113 = ssub.s32 %s11, %s18
    %p114 = scmp.eq.s32.totalorder %s113, 0
    %s116 = sadd.s32 %s115, 1
    %s117 = scalar_select %p114, %s115, %s116
    %p120 = pneg %p114
    %p121 = scmp.eq.s32.totalorder %s11, 1
    %p122 = por %p120, %p121
    %p123 = scmp.ne.s32.totalorder %s115, %s118
    %p124 = scmp.eq.s32.totalorder %s11, 0
    %p125 = por %p123, %p124
    %p126 = scmp.ne.s32.totalorder %s115, %s118
    %p127 = scmp.eq.s32.totalorder %s16, 1
    %p128 = por %p126, %p127
    %p129 = scmp.ne.s32.totalorder %s118, %s119
    %p130 = scmp.eq.s32.totalorder %s16, 0
    %p131 = por %p129, %p130
    %p132 = scmp.ne.s32.totalorder %s118, %s119
    %p133 = scmp.eq.s32.totalorder %s17, 1
    %p134 = por %p132, %p133
    %p136 = scmp.ne.s32.totalorder %s119, %s135
    %p137 = scmp.eq.s32.totalorder %s17, 0
    %p138 = por %p136, %p137
    %p139 = scmp.le.s32.totalorder 1, %s11
    %p140 = scmp.lt.s32.totalorder %s11, 3
    %p141 = pnand %p139, %p140
    %p142 = pneg %p141
    // Predicated region
    $region9: #{module_forward.4} parent=5 // pred_check
      _
    $region10: #{module_forward.4} parent=5 // pred_check_branch
      %144 = sbr.rel (%p141) target = $region12
    $region11: #{module_forward.4} parent=5 // pred_region
      %s145 = ssub.s32 %s11, 1
      // Predicated region
      $region13: #{module_forward.4} parent=11 // pred_check
        %p146 = pneg %p58
      $region14: #{module_forward.4} parent=11 // pred_check_branch
        %148 = sbr.rel (%p146) target = $region16
      $region15: #{module_forward.4} parent=11 // pred_region
        _
      $region16: #{module_forward.4} parent=11 // pred_fallthru
        _
      // Predicated region
      $region17: #{module_forward.4} parent=11 // pred_check
        %p149 = pneg %p79
      $region18: #{module_forward.4} parent=11 // pred_check_branch
        %151 = sbr.rel (%p149) target = $region20
      $region19: #{module_forward.4} parent=11 // pred_region
        _
      $region20: #{module_forward.4} parent=11 // pred_fallthru
        _
    $region12: #{module_forward.4} parent=5 // pred_fallthru
      _
    %p152 = scmp.lt.s32.totalorder %s11, 2
    // Predicated region
    $region21: #{module_forward.4} parent=5 // pred_check
      %p153 = pneg %p152
    $region22: #{module_forward.4} parent=5 // pred_check_branch
      %155 = sbr.rel (%p153) target = $region24
    $region23: #{module_forward.4} parent=5 // pred_region
      // Predicated region
      $region25: #{module_forward.4} parent=23 // pred_check
        %p156 = pneg %p31
      $region26: #{module_forward.4} parent=23 // pred_check_branch
        %158 = sbr.rel (%p156) target = $region28
      $region27: #{module_forward.4} parent=23 // pred_region
        %p159 = scmp.lt.s32.totalorder %s11, 1
        %s160 = scalar_select %p159, %s11, 1
        %s161 = smul.addr %s160, 54
        %s162 = smul.addr %s161, 4
        %s163 = scalar_lea.vmem %s0, %s162
      $region28: #{module_forward.4} parent=23 // pred_fallthru
        _
    $region24: #{module_forward.4} parent=5 // pred_fallthru
      _
    %p164 = scmp.le.s32.totalorder 1, %s11
    %p165 = scmp.lt.s32.totalorder %s11, 3
    %p166 = pnand %p164, %p165
    %p167 = pneg %p166
    // Predicated region
    $region29: #{module_forward.4} parent=5 // pred_check
      _
    $region30: #{module_forward.4} parent=5 // pred_check_branch
      %169 = sbr.rel (%p166) target = $region32
    $region31: #{module_forward.4} parent=5 // pred_region
      %s170 = ssub.s32 %s11, 1
      %p171 = scmp.lt.s32.totalorder %s16, 1
      %s172 = scalar_select %p171, %s16, 1
      %s173 = smul.addr %s172, 54
      %s174 = smul.addr %s173, 4
      %s175 = scalar_lea.vmem %s0, %s174
      %p176 = pneg %p37
      %p177 = pneg %p34
      %p178 = pneg %p58
      %p179 = pneg %p55
      %p180 = pneg %p79
      %p181 = pneg %p76
      %p182 = pneg %p105
      %p183 = pneg %p102
      %p184 = scmp.lt.s32.totalorder %s16, 1
      %s185 = scalar_select %p184, %s16, 1
      %s186 = smul.addr %s185, 32
      %s187 = smul.addr %s186, 8
      %s188 = scalar_lea.vmem %s3, %s187
      %p189 = pneg %p131
      %p190 = pneg %p128
      %p191 = scmp.lt.s32.totalorder %s16, 1
      %s192 = scalar_select %p191, %s16, 1
      %s193 = smul.addr %s192, 2
      %s194 = scalar_lea.vmem %s4, %s193
      %p195 = scmp.lt.s32.totalorder %s16, 1
      %s196 = scalar_select %p195, %s16, 1
      %s197 = smul.addr %s196, 54
      %s198 = smul.addr %s197, 4
      %s199 = scalar_lea.vmem %s0, %s198
      %p200 = scmp.lt.s32.totalorder %s16, 1
      %s201 = scalar_select %p200, %s16, 1
      %s202 = smul.addr %s201, 32
      %s203 = smul.addr %s202, 8
      %s204 = scalar_lea.vmem %s3, %s203
      %p205 = scmp.lt.s32.totalorder %s16, 1
      %s206 = scalar_select %p205, %s16, 1
      %s207 = smul.addr %s206, 2
      %s208 = scalar_lea.vmem %s4, %s207
      %v210 = vld [vmem:[%s199] sm:$0xf]
      %v211 = vld [vmem:[%s199 + $0x4] sm:$0xf]
      %v212 = vld [vmem:[%s199 + $0x8] sm:$0x1]
      %v213 = vld [vmem:[%s199 + $0xc] sm:$0xf]
      %v214 = vld [vmem:[%s199 + $0x10] sm:$0xf]
      %v215 = vld [vmem:[%s199 + $0x14] sm:$0x1]
      %v216 = vld [vmem:[%s199 + $0x18] sm:$0xf]
      %v217 = vld [vmem:[%s199 + $0x1c] sm:$0xf]
      %v218 = vld [vmem:[%s199 + $0x20] sm:$0x1]
      %v219 = vld [vmem:[%s199 + $0x24] sm:$0xf]
      %v220 = vld [vmem:[%s199 + $0x28] sm:$0xf]
      %v221 = vld [vmem:[%s199 + $0x2c] sm:$0x1]
      %v222 = vld [vmem:[%s199 + $0x30] sm:$0xf]
      %v223 = vld [vmem:[%s199 + $0x34] sm:$0xf]
      %v224 = vld [vmem:[%s199 + $0x38] sm:$0x1]
      %v225 = vld [vmem:[%s199 + $0x3c] sm:$0xf]
      %v226 = vld [vmem:[%s199 + $0x40] sm:$0xf]
      %v227 = vld [vmem:[%s199 + $0x44] sm:$0x1]
      %v228 = vld [vmem:[%s199 + $0x48] sm:$0xf]
      %v229 = vld [vmem:[%s199 + $0x4c] sm:$0xf]
      %v230 = vld [vmem:[%s199 + $0x50] sm:$0x1]
      %v231 = vld [vmem:[%s199 + $0x54] sm:$0xf]
      %v232 = vld [vmem:[%s199 + $0x58] sm:$0xf]
      %v233 = vld [vmem:[%s199 + $0x5c] sm:$0x1]
      %v234 = vld [vmem:[%s199 + $0x60] sm:$0xf]
      %v235 = vld [vmem:[%s199 + $0x64] sm:$0xf]
      %v236 = vld [vmem:[%s199 + $0x68] sm:$0x1]
      %v237 = vld [vmem:[%s199 + $0x6c] sm:$0xf]
      %v238 = vld [vmem:[%s199 + $0x70] sm:$0xf]
      %v239 = vld [vmem:[%s199 + $0x74] sm:$0x1]
      %v240 = vld [vmem:[%s199 + $0x78] sm:$0xf]
      %v241 = vld [vmem:[%s199 + $0x7c] sm:$0xf]
      %v242 = vld [vmem:[%s199 + $0x80] sm:$0x1]
      %v243 = vld [vmem:[%s199 + $0x84] sm:$0xf]
      %v244 = vld [vmem:[%s199 + $0x88] sm:$0xf]
      %v245 = vld [vmem:[%s199 + $0x8c] sm:$0x1]
      %v246 = vld [vmem:[%s199 + $0x90] sm:$0xf]
      %v247 = vld [vmem:[%s199 + $0x94] sm:$0xf]
      %v248 = vld [vmem:[%s199 + $0x98] sm:$0x1]
      %v249 = vld [vmem:[%s199 + $0x9c] sm:$0xf]
      %v250 = vld [vmem:[%s199 + $0xa0] sm:$0xf]
      %v251 = vld [vmem:[%s199 + $0xa4] sm:$0x1]
      %v252 = vld [vmem:[%s199 + $0xa8] sm:$0xf]
      %v253 = vld [vmem:[%s199 + $0xac] sm:$0xf]
      %v254 = vld [vmem:[%s199 + $0xb0] sm:$0x1]
      %v255 = vld [vmem:[%s199 + $0xb4] sm:$0xf]
      %v256 = vld [vmem:[%s199 + $0xb8] sm:$0xf]
      %v257 = vld [vmem:[%s199 + $0xbc] sm:$0x1]
      %v258 = vld [vmem:[%s199 + $0xc0] sm:$0xf]
      %v259 = vld [vmem:[%s199 + $0xc4] sm:$0xf]
      %v260 = vld [vmem:[%s199 + $0xc8] sm:$0x1]
      %v261 = vld [vmem:[%s199 + $0xcc] sm:$0xf]
      %v262 = vld [vmem:[%s199 + $0xd0] sm:$0xf]
      %v263 = vld [vmem:[%s199 + $0xd4] sm:$0x1]
      %vm264 = vsmask.f32 3328
      %vm265 = vsmask.f32 7440
      %vm266 = vmor %vm264, %vm265
      %v268 = vshrl.u32 %v210, 16
      %v270 = vrot.slane %v268, 4
      %v271 = vshll.u32 %v210, 16
      %v273 = vrot.slane %v271, 5
      %v274 = vor.u32 %v270, %v273
      %v275 = vrot.slane %v274, 4
      %v277 = vshll.u32 %v211, 16
      %v279 = vrot.slane %v277, 5
      %v280 = vsel %vm266, %v275, %v279
      %v281 = vshrl.u32 %v211, 16
      %v283 = vrot.slane %v281, 4
      %v284 = vor.u32 %v283, %v279
      %v285 = vrot.slane %v284, 4
      %v287 = vshll.u32 %v212, 16
      %v289 = vrot.slane %v287, 5
      %v290 = vsel %vm266, %v285, %v289
      %v292 = vshrl.u32 %v213, 16
      %v294 = vrot.slane %v292, 4
      %v295 = vshll.u32 %v213, 16
      %v297 = vrot.slane %v295, 5
      %v298 = vor.u32 %v294, %v297
      %v299 = vrot.slane %v298, 4
      %v301 = vshll.u32 %v214, 16
      %v303 = vrot.slane %v301, 5
      %v304 = vsel %vm266, %v299, %v303
      %v305 = vshrl.u32 %v214, 16
      %v307 = vrot.slane %v305, 4
      %v308 = vor.u32 %v307, %v303
      %v309 = vrot.slane %v308, 4
      %v311 = vshll.u32 %v215, 16
      %v313 = vrot.slane %v311, 5
      %v314 = vsel %vm266, %v309, %v313
      %v316 = vshrl.u32 %v216, 16
      %v318 = vrot.slane %v316, 4
      %v319 = vshll.u32 %v216, 16
      %v321 = vrot.slane %v319, 5
      %v322 = vor.u32 %v318, %v321
      %v323 = vrot.slane %v322, 4
      %v325 = vshll.u32 %v217, 16
      %v327 = vrot.slane %v325, 5
      %v328 = vsel %vm266, %v323, %v327
      %v329 = vshrl.u32 %v217, 16
      %v331 = vrot.slane %v329, 4
      %v332 = vor.u32 %v331, %v327
      %v333 = vrot.slane %v332, 4
      %v335 = vshll.u32 %v218, 16
      %v337 = vrot.slane %v335, 5
      %v338 = vsel %vm266, %v333, %v337
      %v340 = vshrl.u32 %v219, 16
      %v342 = vrot.slane %v340, 4
      %v343 = vshll.u32 %v219, 16
      %v345 = vrot.slane %v343, 5
      %v346 = vor.u32 %v342, %v345
      %v347 = vrot.slane %v346, 4
      %v349 = vshll.u32 %v220, 16
      %v351 = vrot.slane %v349, 5
      %v352 = vsel %vm266, %v347, %v351
      %v353 = vshrl.u32 %v220, 16
      %v355 = vrot.slane %v353, 4
      %v356 = vor.u32 %v355, %v351
      %v357 = vrot.slane %v356, 4
      %v359 = vshll.u32 %v221, 16
      %v361 = vrot.slane %v359, 5
      %v362 = vsel %vm266, %v357, %v361
      %v364 = vshrl.u32 %v222, 16
      %v366 = vrot.slane %v364, 4
      %v367 = vshll.u32 %v222, 16
      %v369 = vrot.slane %v367, 5
      %v370 = vor.u32 %v366, %v369
      %v371 = vrot.slane %v370, 4
      %v373 = vshll.u32 %v223, 16
      %v375 = vrot.slane %v373, 5
      %v376 = vsel %vm266, %v371, %v375
      %v377 = vshrl.u32 %v223, 16
      %v379 = vrot.slane %v377, 4
      %v380 = vor.u32 %v379, %v375
      %v381 = vrot.slane %v380, 4
      %v383 = vshll.u32 %v224, 16
      %v385 = vrot.slane %v383, 5
      %v386 = vsel %vm266, %v381, %v385
      %v388 = vshrl.u32 %v225, 16
      %v390 = vrot.slane %v388, 4
      %v391 = vshll.u32 %v225, 16
      %v393 = vrot.slane %v391, 5
      %v394 = vor.u32 %v390, %v393
      %v395 = vrot.slane %v394, 4
      %v397 = vshll.u32 %v226, 16
      %v399 = vrot.slane %v397, 5
      %v400 = vsel %vm266, %v395, %v399
      %v401 = vshrl.u32 %v226, 16
      %v403 = vrot.slane %v401, 4
      %v404 = vor.u32 %v403, %v399
      %v405 = vrot.slane %v404, 4
      %v407 = vshll.u32 %v227, 16
      %v409 = vrot.slane %v407, 5
      %v410 = vsel %vm266, %v405, %v409
      %v412 = vshrl.u32 %v228, 16
      %v414 = vrot.slane %v412, 4
      %v415 = vshll.u32 %v228, 16
      %v417 = vrot.slane %v415, 5
      %v418 = vor.u32 %v414, %v417
      %v419 = vrot.slane %v418, 4
      %v421 = vshll.u32 %v229, 16
      %v423 = vrot.slane %v421, 5
      %v424 = vsel %vm266, %v419, %v423
      %v425 = vshrl.u32 %v229, 16
      %v427 = vrot.slane %v425, 4
      %v428 = vor.u32 %v427, %v423
      %v429 = vrot.slane %v428, 4
      %v431 = vshll.u32 %v230, 16
      %v433 = vrot.slane %v431, 5
      %v434 = vsel %vm266, %v429, %v433
      %v436 = vshrl.u32 %v231, 16
      %v438 = vrot.slane %v436, 4
      %v439 = vshll.u32 %v231, 16
      %v441 = vrot.slane %v439, 5
      %v442 = vor.u32 %v438, %v441
      %v443 = vrot.slane %v442, 4
      %v445 = vshll.u32 %v232, 16
      %v447 = vrot.slane %v445, 5
      %v448 = vsel %vm266, %v443, %v447
      %v449 = vshrl.u32 %v232, 16
      %v451 = vrot.slane %v449, 4
      %v452 = vor.u32 %v451, %v447
      %v453 = vrot.slane %v452, 4
      %v455 = vshll.u32 %v233, 16
      %v457 = vrot.slane %v455, 5
      %v458 = vsel %vm266, %v453, %v457
      %v460 = vshrl.u32 %v234, 16
      %v462 = vrot.slane %v460, 4
      %v463 = vshll.u32 %v234, 16
      %v465 = vrot.slane %v463, 5
      %v466 = vor.u32 %v462, %v465
      %v467 = vrot.slane %v466, 4
      %v469 = vshll.u32 %v235, 16
      %v471 = vrot.slane %v469, 5
      %v472 = vsel %vm266, %v467, %v471
      %v473 = vshrl.u32 %v235, 16
      %v475 = vrot.slane %v473, 4
      %v476 = vor.u32 %v475, %v471
      %v477 = vrot.slane %v476, 4
      %v479 = vshll.u32 %v236, 16
      %v481 = vrot.slane %v479, 5
      %v482 = vsel %vm266, %v477, %v481
      %v484 = vshrl.u32 %v237, 16
      %v486 = vrot.slane %v484, 4
      %v487 = vshll.u32 %v237, 16
      %v489 = vrot.slane %v487, 5
      %v490 = vor.u32 %v486, %v489
      %v491 = vrot.slane %v490, 4
      %v493 = vshll.u32 %v238, 16
      %v495 = vrot.slane %v493, 5
      %v496 = vsel %vm266, %v491, %v495
      %v497 = vshrl.u32 %v238, 16
      %v499 = vrot.slane %v497, 4
      %v500 = vor.u32 %v499, %v495
      %v501 = vrot.slane %v500, 4
      %v503 = vshll.u32 %v239, 16
      %v505 = vrot.slane %v503, 5
      %v506 = vsel %vm266, %v501, %v505
      %v508 = vshrl.u32 %v240, 16
      %v510 = vrot.slane %v508, 4
      %v511 = vshll.u32 %v240, 16
      %v513 = vrot.slane %v511, 5
      %v514 = vor.u32 %v510, %v513
      %v515 = vrot.slane %v514, 4
      %v517 = vshll.u32 %v241, 16
      %v519 = vrot.slane %v517, 5
      %v520 = vsel %vm266, %v515, %v519
      %v521 = vshrl.u32 %v241, 16
      %v523 = vrot.slane %v521, 4
      %v524 = vor.u32 %v523, %v519
      %v525 = vrot.slane %v524, 4
      %v527 = vshll.u32 %v242, 16
      %v529 = vrot.slane %v527, 5
      %v530 = vsel %vm266, %v525, %v529
      %v532 = vshrl.u32 %v243, 16
      %v534 = vrot.slane %v532, 4
      %v535 = vshll.u32 %v243, 16
      %v537 = vrot.slane %v535, 5
      %v538 = vor.u32 %v534, %v537
      %v539 = vrot.slane %v538, 4
      %v541 = vshll.u32 %v244, 16
      %v543 = vrot.slane %v541, 5
      %v544 = vsel %vm266, %v539, %v543
      %v545 = vshrl.u32 %v244, 16
      %v547 = vrot.slane %v545, 4
      %v548 = vor.u32 %v547, %v543
      %v549 = vrot.slane %v548, 4
      %v551 = vshll.u32 %v245, 16
      %v553 = vrot.slane %v551, 5
      %v554 = vsel %vm266, %v549, %v553
      %v556 = vshrl.u32 %v246, 16
      %v558 = vrot.slane %v556, 4
      %v559 = vshll.u32 %v246, 16
      %v561 = vrot.slane %v559, 5
      %v562 = vor.u32 %v558, %v561
      %v563 = vrot.slane %v562, 4
      %v565 = vshll.u32 %v247, 16
      %v567 = vrot.slane %v565, 5
      %v568 = vsel %vm266, %v563, %v567
      %v569 = vshrl.u32 %v247, 16
      %v571 = vrot.slane %v569, 4
      %v572 = vor.u32 %v571, %v567
      %v573 = vrot.slane %v572, 4
      %v575 = vshll.u32 %v248, 16
      %v577 = vrot.slane %v575, 5
      %v578 = vsel %vm266, %v573, %v577
      %v580 = vshrl.u32 %v249, 16
      %v582 = vrot.slane %v580, 4
      %v583 = vshll.u32 %v249, 16
      %v585 = vrot.slane %v583, 5
      %v586 = vor.u32 %v582, %v585
      %v587 = vrot.slane %v586, 4
      %v589 = vshll.u32 %v250, 16
      %v591 = vrot.slane %v589, 5
      %v592 = vsel %vm266, %v587, %v591
      %v593 = vshrl.u32 %v250, 16
      %v595 = vrot.slane %v593, 4
      %v596 = vor.u32 %v595, %v591
      %v597 = vrot.slane %v596, 4
      %v599 = vshll.u32 %v251, 16
      %v601 = vrot.slane %v599, 5
      %v602 = vsel %vm266, %v597, %v601
      %v604 = vshrl.u32 %v252, 16
      %v606 = vrot.slane %v604, 4
      %v607 = vshll.u32 %v252, 16
      %v609 = vrot.slane %v607, 5
      %v610 = vor.u32 %v606, %v609
      %v611 = vrot.slane %v610, 4
      %v613 = vshll.u32 %v253, 16
      %v615 = vrot.slane %v613, 5
      %v616 = vsel %vm266, %v611, %v615
      %v617 = vshrl.u32 %v253, 16
      %v619 = vrot.slane %v617, 4
      %v620 = vor.u32 %v619, %v615
      %v621 = vrot.slane %v620, 4
      %v623 = vshll.u32 %v254, 16
      %v625 = vrot.slane %v623, 5
      %v626 = vsel %vm266, %v621, %v625
      %v628 = vshrl.u32 %v255, 16
      %v630 = vrot.slane %v628, 4
      %v631 = vshll.u32 %v255, 16
      %v633 = vrot.slane %v631, 5
      %v634 = vor.u32 %v630, %v633
      %v635 = vrot.slane %v634, 4
      %v637 = vshll.u32 %v256, 16
      %v639 = vrot.slane %v637, 5
      %v640 = vsel %vm266, %v635, %v639
      %v641 = vshrl.u32 %v256, 16
      %v643 = vrot.slane %v641, 4
      %v644 = vor.u32 %v643, %v639
      %v645 = vrot.slane %v644, 4
      %v647 = vshll.u32 %v257, 16
      %v649 = vrot.slane %v647, 5
      %v650 = vsel %vm266, %v645, %v649
      %vm699 = vcmask 1042432
      %vm700 = vcmask 1046532
      %vm701 = vmor %vm699, %vm700
      %v702 = vrot.slane %v210, 5
      %v703 = vrot.slane %v702, 4
      %v704 = vrot.slane %v211, 5
      %v705 = vsel %vm701, %v703, %v704
      %v706 = vrot.slane %v704, 4
      %v707 = vrot.slane %v212, 5
      %v708 = vsel %vm701, %v706, %v707
      %v709 = vrot.slane %v213, 5
      %v710 = vrot.slane %v709, 4
      %v711 = vrot.slane %v214, 5
      %v712 = vsel %vm701, %v710, %v711
      %v713 = vrot.slane %v711, 4
      %v714 = vrot.slane %v215, 5
      %v715 = vsel %vm701, %v713, %v714
      %v716 = vrot.slane %v216, 5
      %v717 = vrot.slane %v716, 4
      %v718 = vrot.slane %v217, 5
      %v719 = vsel %vm701, %v717, %v718
      %v720 = vrot.slane %v718, 4
      %v721 = vrot.slane %v218, 5
      %v722 = vsel %vm701, %v720, %v721
      %v723 = vrot.slane %v219, 5
      %v724 = vrot.slane %v723, 4
      %v725 = vrot.slane %v220, 5
      %v726 = vsel %vm701, %v724, %v725
      %v727 = vrot.slane %v725, 4
      %v728 = vrot.slane %v221, 5
      %v729 = vsel %vm701, %v727, %v728
      %v730 = vrot.slane %v222, 5
      %v731 = vrot.slane %v730, 4
      %v732 = vrot.slane %v223, 5
      %v733 = vsel %vm701, %v731, %v732
      %v734 = vrot.slane %v732, 4
      %v735 = vrot.slane %v224, 5
      %v736 = vsel %vm701, %v734, %v735
      %v737 = vrot.slane %v225, 5
      %v738 = vrot.slane %v737, 4
      %v739 = vrot.slane %v226, 5
      %v740 = vsel %vm701, %v738, %v739
      %v741 = vrot.slane %v739, 4
      %v742 = vrot.slane %v227, 5
      %v743 = vsel %vm701, %v741, %v742
      %v744 = vrot.slane %v228, 5
      %v745 = vrot.slane %v744, 4
      %v746 = vrot.slane %v229, 5
      %v747 = vsel %vm701, %v745, %v746
      %v748 = vrot.slane %v746, 4
      %v749 = vrot.slane %v230, 5
      %v750 = vsel %vm701, %v748, %v749
      %v751 = vrot.slane %v231, 5
      %v752 = vrot.slane %v751, 4
      %v753 = vrot.slane %v232, 5
      %v754 = vsel %vm701, %v752, %v753
      %v755 = vrot.slane %v753, 4
      %v756 = vrot.slane %v233, 5
      %v757 = vsel %vm701, %v755, %v756
      %v758 = vrot.slane %v234, 5
      %v759 = vrot.slane %v758, 4
      %v760 = vrot.slane %v235, 5
      %v761 = vsel %vm701, %v759, %v760
      %v762 = vrot.slane %v760, 4
      %v763 = vrot.slane %v236, 5
      %v764 = vsel %vm701, %v762, %v763
      %v765 = vrot.slane %v237, 5
      %v766 = vrot.slane %v765, 4
      %v767 = vrot.slane %v238, 5
      %v768 = vsel %vm701, %v766, %v767
      %v769 = vrot.slane %v767, 4
      %v770 = vrot.slane %v239, 5
      %v771 = vsel %vm701, %v769, %v770
      %v772 = vrot.slane %v240, 5
      %v773 = vrot.slane %v772, 4
      %v774 = vrot.slane %v241, 5
      %v775 = vsel %vm701, %v773, %v774
      %v776 = vrot.slane %v774, 4
      %v777 = vrot.slane %v242, 5
      %v778 = vsel %vm701, %v776, %v777
      %v779 = vrot.slane %v243, 5
      %v780 = vrot.slane %v779, 4
      %v781 = vrot.slane %v244, 5
      %v782 = vsel %vm701, %v780, %v781
      %v783 = vrot.slane %v781, 4
      %v784 = vrot.slane %v245, 5
      %v785 = vsel %vm701, %v783, %v784
      %v786 = vrot.slane %v246, 5
      %v787 = vrot.slane %v786, 4
      %v788 = vrot.slane %v247, 5
      %v789 = vsel %vm701, %v787, %v788
      %v790 = vrot.slane %v788, 4
      %v791 = vrot.slane %v248, 5
      %v792 = vsel %vm701, %v790, %v791
      %v793 = vrot.slane %v249, 5
      %v794 = vrot.slane %v793, 4
      %v795 = vrot.slane %v250, 5
      %v796 = vsel %vm701, %v794, %v795
      %v797 = vrot.slane %v795, 4
      %v798 = vrot.slane %v251, 5
      %v799 = vsel %vm701, %v797, %v798
      %v800 = vrot.slane %v252, 5
      %v801 = vrot.slane %v800, 4
      %v802 = vrot.slane %v253, 5
      %v803 = vsel %vm701, %v801, %v802
      %v804 = vrot.slane %v802, 4
      %v805 = vrot.slane %v254, 5
      %v806 = vsel %vm701, %v804, %v805
      %v807 = vrot.slane %v255, 5
      %v808 = vrot.slane %v807, 4
      %v809 = vrot.slane %v256, 5
      %v810 = vsel %vm701, %v808, %v809
      %v811 = vrot.slane %v809, 4
      %v812 = vrot.slane %v257, 5
      %v813 = vsel %vm701, %v811, %v812
      %v815 = vshrl.u32 %v258, 16
      %v817 = vrot.slane %v815, 4
      %v818 = vshll.u32 %v258, 16
      %v820 = vrot.slane %v818, 5
      %v821 = vor.u32 %v817, %v820
      %v822 = vrot.slane %v821, 4
      %v824 = vshll.u32 %v259, 16
      %v826 = vrot.slane %v824, 5
      %v827 = vsel %vm266, %v822, %v826
      %v828 = vshrl.u32 %v259, 16
      %v830 = vrot.slane %v828, 4
      %v831 = vor.u32 %v830, %v826
      %v832 = vrot.slane %v831, 4
      %v834 = vshll.u32 %v260, 16
      %v836 = vrot.slane %v834, 5
      %v837 = vsel %vm266, %v832, %v836
      %v841 = vrot.slane %v258, 5
      %v842 = vrot.slane %v841, 4
      %v843 = vrot.slane %v259, 5
      %v844 = vsel %vm701, %v842, %v843
      %v845 = vrot.slane %v843, 4
      %v846 = vrot.slane %v260, 5
      %v847 = vsel %vm701, %v845, %v846
      %v849 = vshrl.u32 %v261, 16
      %v851 = vrot.slane %v849, 4
      %v852 = vshll.u32 %v261, 16
      %v854 = vrot.slane %v852, 5
      %v855 = vor.u32 %v851, %v854
      %v856 = vrot.slane %v855, 4
      %v858 = vshll.u32 %v262, 16
      %v860 = vrot.slane %v858, 5
      %v861 = vsel %vm266, %v856, %v860
      %v862 = vshrl.u32 %v262, 16
      %v864 = vrot.slane %v862, 4
      %v865 = vor.u32 %v864, %v860
      %v866 = vrot.slane %v865, 4
      %v868 = vshll.u32 %v263, 16
      %v870 = vrot.slane %v868, 5
      %v871 = vsel %vm266, %v866, %v870
      %v875 = vrot.slane %v261, 5
      %v876 = vrot.slane %v875, 4
      %v877 = vrot.slane %v262, 5
      %v878 = vsel %vm701, %v876, %v877
      %v879 = vrot.slane %v877, 4
      %v880 = vrot.slane %v263, 5
      %v881 = vsel %vm701, %v879, %v880
      %v882 = vunpack.c.l.b16 %v210
      %v883 = vunpack.c.l.b16 %v211
      %v884 = vunpack.c.l.b16 %v213
      %v885 = vunpack.c.l.b16 %v214
      %v886 = vunpack.c.l.b16 %v216
      %v887 = vunpack.c.l.b16 %v217
      %v888 = vunpack.c.l.b16 %v219
      %v889 = vunpack.c.l.b16 %v220
      %v890 = vunpack.c.l.b16 %v222
      %v891 = vunpack.c.l.b16 %v223
      %v892 = vunpack.c.l.b16 %v225
      %v893 = vunpack.c.l.b16 %v226
      %v894 = vunpack.c.l.b16 %v228
      %v895 = vunpack.c.l.b16 %v229
      %v896 = vunpack.c.l.b16 %v231
      %v897 = vunpack.c.l.b16 %v232
      %v898 = vunpack.c.l.b16 %v234
      %v899 = vunpack.c.l.b16 %v235
      %v900 = vunpack.c.l.b16 %v237
      %v901 = vunpack.c.l.b16 %v238
      %v902 = vunpack.c.l.b16 %v240
      %v903 = vunpack.c.l.b16 %v241
      %v904 = vunpack.c.l.b16 %v243
      %v905 = vunpack.c.l.b16 %v244
      %v906 = vunpack.c.l.b16 %v246
      %v907 = vunpack.c.l.b16 %v247
      %v908 = vunpack.c.l.b16 %v249
      %v909 = vunpack.c.l.b16 %v250
      %v910 = vunpack.c.l.b16 %v252
      %v911 = vunpack.c.l.b16 %v253
      %v912 = vunpack.c.l.b16 %v255
      %v913 = vunpack.c.l.b16 %v256
      %v914 = vpack.c.b16 %v883, %v882
      %v915 = vpack.c.b16 %v885, %v884
      %v916 = vpack.c.b16 %v887, %v886
      %v917 = vpack.c.b16 %v889, %v888
      %v918 = vpack.c.b16 %v891, %v890
      %v919 = vpack.c.b16 %v893, %v892
      %v920 = vpack.c.b16 %v895, %v894
      %v921 = vpack.c.b16 %v897, %v896
      %v922 = vpack.c.b16 %v899, %v898
      %v923 = vpack.c.b16 %v901, %v900
      %v924 = vpack.c.b16 %v903, %v902
      %v925 = vpack.c.b16 %v905, %v904
      %v926 = vpack.c.b16 %v907, %v906
      %v927 = vpack.c.b16 %v909, %v908
      %v928 = vpack.c.b16 %v911, %v910
      %v929 = vpack.c.b16 %v913, %v912
      %v930 = vunpack.c.l.b16 %v280
      %v931 = vunpack.c.l.b16 %v290
      %v932 = vunpack.c.l.b16 %v304
      %v933 = vunpack.c.l.b16 %v314
      %v934 = vunpack.c.l.b16 %v328
      %v935 = vunpack.c.l.b16 %v338
      %v936 = vunpack.c.l.b16 %v352
      %v937 = vunpack.c.l.b16 %v362
      %v938 = vunpack.c.l.b16 %v376
      %v939 = vunpack.c.l.b16 %v386
      %v940 = vunpack.c.l.b16 %v400
      %v941 = vunpack.c.l.b16 %v410
      %v942 = vunpack.c.l.b16 %v424
      %v943 = vunpack.c.l.b16 %v434
      %v944 = vunpack.c.l.b16 %v448
      %v945 = vunpack.c.l.b16 %v458
      %v946 = vunpack.c.l.b16 %v472
      %v947 = vunpack.c.l.b16 %v482
      %v948 = vunpack.c.l.b16 %v496
      %v949 = vunpack.c.l.b16 %v506
      %v950 = vunpack.c.l.b16 %v520
      %v951 = vunpack.c.l.b16 %v530
      %v952 = vunpack.c.l.b16 %v544
      %v953 = vunpack.c.l.b16 %v554
      %v954 = vunpack.c.l.b16 %v568
      %v955 = vunpack.c.l.b16 %v578
      %v956 = vunpack.c.l.b16 %v592
      %v957 = vunpack.c.l.b16 %v602
      %v958 = vunpack.c.l.b16 %v616
      %v959 = vunpack.c.l.b16 %v626
      %v960 = vunpack.c.l.b16 %v640
      %v961 = vunpack.c.l.b16 %v650
      %v962 = vpack.c.b16 %v931, %v930
      %v963 = vpack.c.b16 %v933, %v932
      %v964 = vpack.c.b16 %v935, %v934
      %v965 = vpack.c.b16 %v937, %v936
      %v966 = vpack.c.b16 %v939, %v938
      %v967 = vpack.c.b16 %v941, %v940
      %v968 = vpack.c.b16 %v943, %v942
      %v969 = vpack.c.b16 %v945, %v944
      %v970 = vpack.c.b16 %v947, %v946
      %v971 = vpack.c.b16 %v949, %v948
      %v972 = vpack.c.b16 %v951, %v950
      %v973 = vpack.c.b16 %v953, %v952
      %v974 = vpack.c.b16 %v955, %v954
      %v975 = vpack.c.b16 %v957, %v956
      %v976 = vpack.c.b16 %v959, %v958
      %v977 = vpack.c.b16 %v961, %v960
      %978 = vrot.lane.b32.xlu0 %v962, 32
      %v979 = vpop.permute.xlu0 %978
      %980 = vrot.lane.b32.xlu0 %v963, 32
      %v981 = vpop.permute.xlu0 %980
      %982 = vrot.lane.b32.xlu0 %v964, 32
      %v983 = vpop.permute.xlu0 %982
      %984 = vrot.lane.b32.xlu0 %v965, 32
      %v985 = vpop.permute.xlu0 %984
      %986 = vrot.lane.b32.xlu0 %v966, 32
      %v987 = vpop.permute.xlu0 %986
      %988 = vrot.lane.b32.xlu0 %v967, 32
      %v989 = vpop.permute.xlu0 %988
      %990 = vrot.lane.b32.xlu0 %v968, 32
      %v991 = vpop.permute.xlu0 %990
      %992 = vrot.lane.b32.xlu0 %v969, 32
      %v993 = vpop.permute.xlu0 %992
      %994 = vrot.lane.b32.xlu0 %v970, 32
      %v995 = vpop.permute.xlu0 %994
      %996 = vrot.lane.b32.xlu0 %v971, 32
      %v997 = vpop.permute.xlu0 %996
      %998 = vrot.lane.b32.xlu0 %v972, 32
      %v999 = vpop.permute.xlu0 %998
      %1000 = vrot.lane.b32.xlu0 %v973, 32
      %v1001 = vpop.permute.xlu0 %1000
      %1002 = vrot.lane.b32.xlu0 %v974, 32
      %v1003 = vpop.permute.xlu0 %1002
      %1004 = vrot.lane.b32.xlu0 %v975, 32
      %v1005 = vpop.permute.xlu0 %1004
      %1006 = vrot.lane.b32.xlu0 %v976, 32
      %v1007 = vpop.permute.xlu0 %1006
      %1008 = vrot.lane.b32.xlu0 %v977, 32
      %v1009 = vpop.permute.xlu0 %1008
      %v1010 = vunpack.c.l.b16 %v705
      %v1011 = vunpack.c.l.b16 %v708
      %v1012 = vunpack.c.l.b16 %v712
      %v1013 = vunpack.c.l.b16 %v715
      %v1014 = vunpack.c.l.b16 %v719
      %v1015 = vunpack.c.l.b16 %v722
      %v1016 = vunpack.c.l.b16 %v726
      %v1017 = vunpack.c.l.b16 %v729
      %v1018 = vunpack.c.l.b16 %v733
      %v1019 = vunpack.c.l.b16 %v736
      %v1020 = vunpack.c.l.b16 %v740
      %v1021 = vunpack.c.l.b16 %v743
      %v1022 = vunpack.c.l.b16 %v747
      %v1023 = vunpack.c.l.b16 %v750
      %v1024 = vunpack.c.l.b16 %v754
      %v1025 = vunpack.c.l.b16 %v757
      %v1026 = vunpack.c.l.b16 %v761
      %v1027 = vunpack.c.l.b16 %v764
      %v1028 = vunpack.c.l.b16 %v768
      %v1029 = vunpack.c.l.b16 %v771
      %v1030 = vunpack.c.l.b16 %v775
      %v1031 = vunpack.c.l.b16 %v778
      %v1032 = vunpack.c.l.b16 %v782
      %v1033 = vunpack.c.l.b16 %v785
      %v1034 = vunpack.c.l.b16 %v789
      %v1035 = vunpack.c.l.b16 %v792
      %v1036 = vunpack.c.l.b16 %v796
      %v1037 = vunpack.c.l.b16 %v799
      %v1038 = vunpack.c.l.b16 %v803
      %v1039 = vunpack.c.l.b16 %v806
      %v1040 = vunpack.c.l.b16 %v810
      %v1041 = vunpack.c.l.b16 %v813
      %v1042 = vpack.c.b16 %v1011, %v1010
      %v1043 = vpack.c.b16 %v1013, %v1012
      %v1044 = vpack.c.b16 %v1015, %v1014
      %v1045 = vpack.c.b16 %v1017, %v1016
      %v1046 = vpack.c.b16 %v1019, %v1018
      %v1047 = vpack.c.b16 %v1021, %v1020
      %v1048 = vpack.c.b16 %v1023, %v1022
      %v1049 = vpack.c.b16 %v1025, %v1024
      %v1050 = vpack.c.b16 %v1027, %v1026
      %v1051 = vpack.c.b16 %v1029, %v1028
      %v1052 = vpack.c.b16 %v1031, %v1030
      %v1053 = vpack.c.b16 %v1033, %v1032
      %v1054 = vpack.c.b16 %v1035, %v1034
      %v1055 = vpack.c.b16 %v1037, %v1036
      %v1056 = vpack.c.b16 %v1039, %v1038
      %v1057 = vpack.c.b16 %v1041, %v1040
      %1058 = vrot.lane.b32.xlu0 %v1042, 64
      %v1059 = vpop.permute.xlu0 %1058
      %1060 = vrot.lane.b32.xlu0 %v1043, 64
      %v1061 = vpop.permute.xlu0 %1060
      %1062 = vrot.lane.b32.xlu0 %v1044, 64
      %v1063 = vpop.permute.xlu0 %1062
      %1064 = vrot.lane.b32.xlu0 %v1045, 64
      %v1065 = vpop.permute.xlu0 %1064
      %1066 = vrot.lane.b32.xlu0 %v1046, 64
      %v1067 = vpop.permute.xlu0 %1066
      %1068 = vrot.lane.b32.xlu0 %v1047, 64
      %v1069 = vpop.permute.xlu0 %1068
      %1070 = vrot.lane.b32.xlu0 %v1048, 64
      %v1071 = vpop.permute.xlu0 %1070
      %1072 = vrot.lane.b32.xlu0 %v1049, 64
      %v1073 = vpop.permute.xlu0 %1072
      %1074 = vrot.lane.b32.xlu0 %v1050, 64
      %v1075 = vpop.permute.xlu0 %1074
      %1076 = vrot.lane.b32.xlu0 %v1051, 64
      %v1077 = vpop.permute.xlu0 %1076
      %1078 = vrot.lane.b32.xlu0 %v1052, 64
      %v1079 = vpop.permute.xlu0 %1078
      %1080 = vrot.lane.b32.xlu0 %v1053, 64
      %v1081 = vpop.permute.xlu0 %1080
      %1082 = vrot.lane.b32.xlu0 %v1054, 64
      %v1083 = vpop.permute.xlu0 %1082
      %1084 = vrot.lane.b32.xlu0 %v1055, 64
      %v1085 = vpop.permute.xlu0 %1084
      %1086 = vrot.lane.b32.xlu0 %v1056, 64
      %v1087 = vpop.permute.xlu0 %1086
      %1088 = vrot.lane.b32.xlu0 %v1057, 64
      %v1089 = vpop.permute.xlu0 %1088
      %v1090 = vunpack.c.l.b16 %v258
      %v1091 = vunpack.c.l.b16 %v259
      %v1092 = vpack.c.b16 %v1091, %v1090
      %1093 = vrot.lane.b32.xlu0 %v915, 96
      %v1094 = vpop.permute.xlu0 %1093
      %1095 = vrot.lane.b32.xlu0 %v916, 96
      %v1096 = vpop.permute.xlu0 %1095
      %1097 = vrot.lane.b32.xlu0 %v917, 96
      %v1098 = vpop.permute.xlu0 %1097
      %1099 = vrot.lane.b32.xlu0 %v918, 96
      %v1100 = vpop.permute.xlu0 %1099
      %1101 = vrot.lane.b32.xlu0 %v919, 96
      %v1102 = vpop.permute.xlu0 %1101
      %1103 = vrot.lane.b32.xlu0 %v920, 96
      %v1104 = vpop.permute.xlu0 %1103
      %1105 = vrot.lane.b32.xlu0 %v921, 96
      %v1106 = vpop.permute.xlu0 %1105
      %1107 = vrot.lane.b32.xlu0 %v922, 96
      %v1108 = vpop.permute.xlu0 %1107
      %1109 = vrot.lane.b32.xlu0 %v923, 96
      %v1110 = vpop.permute.xlu0 %1109
      %1111 = vrot.lane.b32.xlu0 %v924, 96
      %v1112 = vpop.permute.xlu0 %1111
      %1113 = vrot.lane.b32.xlu0 %v925, 96
      %v1114 = vpop.permute.xlu0 %1113
      %1115 = vrot.lane.b32.xlu0 %v926, 96
      %v1116 = vpop.permute.xlu0 %1115
      %1117 = vrot.lane.b32.xlu0 %v927, 96
      %v1118 = vpop.permute.xlu0 %1117
      %1119 = vrot.lane.b32.xlu0 %v928, 96
      %v1120 = vpop.permute.xlu0 %1119
      %1121 = vrot.lane.b32.xlu0 %v929, 96
      %v1122 = vpop.permute.xlu0 %1121
      %1123 = vrot.lane.b32.xlu0 %v1092, 96
      %v1124 = vpop.permute.xlu0 %1123
      %v1125 = vunpack.c.l.b16 %v827
      %v1126 = vunpack.c.l.b16 %v837
      %v1127 = vpack.c.b16 %v1126, %v1125
      %v1128 = vunpack.c.l.b16 %v844
      %v1129 = vunpack.c.l.b16 %v847
      %v1130 = vpack.c.b16 %v1129, %v1128
      %1131 = vrot.lane.b32.xlu0 %v1043, 32
      %v1132 = vpop.permute.xlu0 %1131
      %1133 = vrot.lane.b32.xlu0 %v1044, 32
      %v1134 = vpop.permute.xlu0 %1133
      %1135 = vrot.lane.b32.xlu0 %v1045, 32
      %v1136 = vpop.permute.xlu0 %1135
      %1137 = vrot.lane.b32.xlu0 %v1046, 32
      %v1138 = vpop.permute.xlu0 %1137
      %1139 = vrot.lane.b32.xlu0 %v1047, 32
      %v1140 = vpop.permute.xlu0 %1139
      %1141 = vrot.lane.b32.xlu0 %v1048, 32
      %v1142 = vpop.permute.xlu0 %1141
      %1143 = vrot.lane.b32.xlu0 %v1049, 32
      %v1144 = vpop.permute.xlu0 %1143
      %1145 = vrot.lane.b32.xlu0 %v1050, 32
      %v1146 = vpop.permute.xlu0 %1145
      %1147 = vrot.lane.b32.xlu0 %v1051, 32
      %v1148 = vpop.permute.xlu0 %1147
      %1149 = vrot.lane.b32.xlu0 %v1052, 32
      %v1150 = vpop.permute.xlu0 %1149
      %1151 = vrot.lane.b32.xlu0 %v1053, 32
      %v1152 = vpop.permute.xlu0 %1151
      %1153 = vrot.lane.b32.xlu0 %v1054, 32
      %v1154 = vpop.permute.xlu0 %1153
      %1155 = vrot.lane.b32.xlu0 %v1055, 32
      %v1156 = vpop.permute.xlu0 %1155
      %1157 = vrot.lane.b32.xlu0 %v1056, 32
      %v1158 = vpop.permute.xlu0 %1157
      %1159 = vrot.lane.b32.xlu0 %v1057, 32
      %v1160 = vpop.permute.xlu0 %1159
      %1161 = vrot.lane.b32.xlu0 %v1130, 32
      %v1162 = vpop.permute.xlu0 %1161
      %v1163 = vunpack.c.l.b16 %v261
      %v1164 = vunpack.c.l.b16 %v262
      %v1165 = vpack.c.b16 %v1164, %v1163
      %1166 = vrot.lane.b32.xlu0 %v916, 64
      %v1167 = vpop.permute.xlu0 %1166
      %1168 = vrot.lane.b32.xlu0 %v917, 64
      %v1169 = vpop.permute.xlu0 %1168
      %1170 = vrot.lane.b32.xlu0 %v918, 64
      %v1171 = vpop.permute.xlu0 %1170
      %1172 = vrot.lane.b32.xlu0 %v919, 64
      %v1173 = vpop.permute.xlu0 %1172
      %1174 = vrot.lane.b32.xlu0 %v920, 64
      %v1175 = vpop.permute.xlu0 %1174
      %1176 = vrot.lane.b32.xlu0 %v921, 64
      %v1177 = vpop.permute.xlu0 %1176
      %1178 = vrot.lane.b32.xlu0 %v922, 64
      %v1179 = vpop.permute.xlu0 %1178
      %1180 = vrot.lane.b32.xlu0 %v923, 64
      %v1181 = vpop.permute.xlu0 %1180
      %1182 = vrot.lane.b32.xlu0 %v924, 64
      %v1183 = vpop.permute.xlu0 %1182
      %1184 = vrot.lane.b32.xlu0 %v925, 64
      %v1185 = vpop.permute.xlu0 %1184
      %1186 = vrot.lane.b32.xlu0 %v926, 64
      %v1187 = vpop.permute.xlu0 %1186
      %1188 = vrot.lane.b32.xlu0 %v927, 64
      %v1189 = vpop.permute.xlu0 %1188
      %1190 = vrot.lane.b32.xlu0 %v928, 64
      %v1191 = vpop.permute.xlu0 %1190
      %1192 = vrot.lane.b32.xlu0 %v929, 64
      %v1193 = vpop.permute.xlu0 %1192
      %1194 = vrot.lane.b32.xlu0 %v1092, 64
      %v1195 = vpop.permute.xlu0 %1194
      %1196 = vrot.lane.b32.xlu0 %v1165, 64
      %v1197 = vpop.permute.xlu0 %1196
      %v1198 = vunpack.c.l.b16 %v861
      %v1199 = vunpack.c.l.b16 %v871
      %v1200 = vpack.c.b16 %v1199, %v1198
      %1201 = vrot.lane.b32.xlu0 %v964, 96
      %v1202 = vpop.permute.xlu0 %1201
      %1203 = vrot.lane.b32.xlu0 %v965, 96
      %v1204 = vpop.permute.xlu0 %1203
      %1205 = vrot.lane.b32.xlu0 %v966, 96
      %v1206 = vpop.permute.xlu0 %1205
      %1207 = vrot.lane.b32.xlu0 %v967, 96
      %v1208 = vpop.permute.xlu0 %1207
      %1209 = vrot.lane.b32.xlu0 %v968, 96
      %v1210 = vpop.permute.xlu0 %1209
      %1211 = vrot.lane.b32.xlu0 %v969, 96
      %v1212 = vpop.permute.xlu0 %1211
      %1213 = vrot.lane.b32.xlu0 %v970, 96
      %v1214 = vpop.permute.xlu0 %1213
      %1215 = vrot.lane.b32.xlu0 %v971, 96
      %v1216 = vpop.permute.xlu0 %1215
      %1217 = vrot.lane.b32.xlu0 %v972, 96
      %v1218 = vpop.permute.xlu0 %1217
      %1219 = vrot.lane.b32.xlu0 %v973, 96
      %v1220 = vpop.permute.xlu0 %1219
      %1221 = vrot.lane.b32.xlu0 %v974, 96
      %v1222 = vpop.permute.xlu0 %1221
      %1223 = vrot.lane.b32.xlu0 %v975, 96
      %v1224 = vpop.permute.xlu0 %1223
      %1225 = vrot.lane.b32.xlu0 %v976, 96
      %v1226 = vpop.permute.xlu0 %1225
      %1227 = vrot.lane.b32.xlu0 %v977, 96
      %v1228 = vpop.permute.xlu0 %1227
      %1229 = vrot.lane.b32.xlu0 %v1127, 96
      %v1230 = vpop.permute.xlu0 %1229
      %1231 = vrot.lane.b32.xlu0 %v1200, 96
      %v1232 = vpop.permute.xlu0 %1231
      %v1233 = vunpack.c.l.b16 %v878
      %v1234 = vunpack.c.l.b16 %v881
      %v1235 = vpack.c.b16 %v1234, %v1233
      %vm1236 = vcmask 261120
      %v1239 = vsel %vm1236, %v914, %v979
      %v1242 = vsel %vm1236, %v915, %v981
      %v1245 = vsel %vm1236, %v916, %v983
      %v1248 = vsel %vm1236, %v917, %v985
      %v1251 = vsel %vm1236, %v918, %v987
      %v1254 = vsel %vm1236, %v919, %v989
      %v1257 = vsel %vm1236, %v920, %v991
      %v1260 = vsel %vm1236, %v921, %v993
      %v1263 = vsel %vm1236, %v922, %v995
      %v1266 = vsel %vm1236, %v923, %v997
      %v1269 = vsel %vm1236, %v924, %v999
      %v1272 = vsel %vm1236, %v925, %v1001
      %v1275 = vsel %vm1236, %v926, %v1003
      %v1278 = vsel %vm1236, %v927, %v1005
      %v1281 = vsel %vm1236, %v928, %v1007
      %v1284 = vsel %vm1236, %v929, %v1009
      %vm1285 = vcmask 523264
      %v1287 = vsel %vm1285, %v1239, %v1059
      %v1289 = vsel %vm1285, %v1242, %v1061
      %v1291 = vsel %vm1285, %v1245, %v1063
      %v1293 = vsel %vm1285, %v1248, %v1065
      %v1295 = vsel %vm1285, %v1251, %v1067
      %v1297 = vsel %vm1285, %v1254, %v1069
      %v1299 = vsel %vm1285, %v1257, %v1071
      %v1301 = vsel %vm1285, %v1260, %v1073
      %v1303 = vsel %vm1285, %v1263, %v1075
      %v1305 = vsel %vm1285, %v1266, %v1077
      %v1307 = vsel %vm1285, %v1269, %v1079
      %v1309 = vsel %vm1285, %v1272, %v1081
      %v1311 = vsel %vm1285, %v1275, %v1083
      %v1313 = vsel %vm1285, %v1278, %v1085
      %v1315 = vsel %vm1285, %v1281, %v1087
      %v1317 = vsel %vm1285, %v1284, %v1089
      %vm1318 = vcmask 785408
      %v1320 = vsel %vm1318, %v1287, %v1094
      %v1323 = vsel %vm1318, %v1289, %v1096
      %v1326 = vsel %vm1318, %v1291, %v1098
      %v1329 = vsel %vm1318, %v1293, %v1100
      %v1332 = vsel %vm1318, %v1295, %v1102
      %v1335 = vsel %vm1318, %v1297, %v1104
      %v1338 = vsel %vm1318, %v1299, %v1106
      %v1341 = vsel %vm1318, %v1301, %v1108
      %v1344 = vsel %vm1318, %v1303, %v1110
      %v1347 = vsel %vm1318, %v1305, %v1112
      %v1350 = vsel %vm1318, %v1307, %v1114
      %v1353 = vsel %vm1318, %v1309, %v1116
      %v1356 = vsel %vm1318, %v1311, %v1118
      %v1359 = vsel %vm1318, %v1313, %v1120
      %v1362 = vsel %vm1318, %v1315, %v1122
      %v1365 = vsel %vm1318, %v1317, %v1124
      %v1369 = vsel %vm1236, %v963, %v1132
      %v1372 = vsel %vm1236, %v964, %v1134
      %v1375 = vsel %vm1236, %v965, %v1136
      %v1378 = vsel %vm1236, %v966, %v1138
      %v1381 = vsel %vm1236, %v967, %v1140
      %v1384 = vsel %vm1236, %v968, %v1142
      %v1387 = vsel %vm1236, %v969, %v1144
      %v1390 = vsel %vm1236, %v970, %v1146
      %v1393 = vsel %vm1236, %v971, %v1148
      %v1396 = vsel %vm1236, %v972, %v1150
      %v1399 = vsel %vm1236, %v973, %v1152
      %v1402 = vsel %vm1236, %v974, %v1154
      %v1405 = vsel %vm1236, %v975, %v1156
      %v1408 = vsel %vm1236, %v976, %v1158
      %v1411 = vsel %vm1236, %v977, %v1160
      %v1414 = vsel %vm1236, %v1127, %v1162
      %v1416 = vsel %vm1285, %v1369, %v1167
      %v1418 = vsel %vm1285, %v1372, %v1169
      %v1420 = vsel %vm1285, %v1375, %v1171
      %v1422 = vsel %vm1285, %v1378, %v1173
      %v1424 = vsel %vm1285, %v1381, %v1175
      %v1426 = vsel %vm1285, %v1384, %v1177
      %v1428 = vsel %vm1285, %v1387, %v1179
      %v1430 = vsel %vm1285, %v1390, %v1181
      %v1432 = vsel %vm1285, %v1393, %v1183
      %v1434 = vsel %vm1285, %v1396, %v1185
      %v1436 = vsel %vm1285, %v1399, %v1187
      %v1438 = vsel %vm1285, %v1402, %v1189
      %v1440 = vsel %vm1285, %v1405, %v1191
      %v1442 = vsel %vm1285, %v1408, %v1193
      %v1444 = vsel %vm1285, %v1411, %v1195
      %v1446 = vsel %vm1285, %v1414, %v1197
      %v1448 = vsel %vm1318, %v1416, %v1202
      %v1451 = vsel %vm1318, %v1418, %v1204
      %v1454 = vsel %vm1318, %v1420, %v1206
      %v1457 = vsel %vm1318, %v1422, %v1208
      %v1460 = vsel %vm1318, %v1424, %v1210
      %v1463 = vsel %vm1318, %v1426, %v1212
      %v1466 = vsel %vm1318, %v1428, %v1214
      %v1469 = vsel %vm1318, %v1430, %v1216
      %v1472 = vsel %vm1318, %v1432, %v1218
      %v1475 = vsel %vm1318, %v1434, %v1220
      %v1478 = vsel %vm1318, %v1436, %v1222
      %v1481 = vsel %vm1318, %v1438, %v1224
      %v1484 = vsel %vm1318, %v1440, %v1226
      %v1487 = vsel %vm1318, %v1442, %v1228
      %v1490 = vsel %vm1318, %v1444, %v1230
      %v1493 = vsel %vm1318, %v1446, %v1232
      %v1495 = vld [vmem:[%s1] sm:$0xf]
      %v1496 = vld [vmem:[%s1 + $0x4] sm:$0xf]
      %v1497 = vld [vmem:[%s1 + $0x8] sm:$0xf]
      %v1498 = vld [vmem:[%s1 + $0xc] sm:$0xf]
      %v1499 = vld [vmem:[%s1 + $0x10] sm:$0xf]
      %v1500 = vld [vmem:[%s1 + $0x14] sm:$0xf]
      %v1501 = vld [vmem:[%s1 + $0x18] sm:$0xf]
      %v1502 = vld [vmem:[%s1 + $0x1c] sm:$0xf]
      %v1503 = vld [vmem:[%s1 + $0x20] sm:$0xf]
      %v1504 = vld [vmem:[%s1 + $0x24] sm:$0xf]
      %v1505 = vld [vmem:[%s1 + $0x28] sm:$0xf]
      %v1506 = vld [vmem:[%s1 + $0x2c] sm:$0xf]
      %v1507 = vld [vmem:[%s1 + $0x30] sm:$0xf]
      %v1508 = vld [vmem:[%s1 + $0x34] sm:$0xf]
      %v1509 = vld [vmem:[%s1 + $0x38] sm:$0xf]
      %v1510 = vld [vmem:[%s1 + $0x3c] sm:$0xf]
      %v1511 = vld [vmem:[%s1 + $0x40] sm:$0xf]
      %v1512 = vld [vmem:[%s1 + $0x44] sm:$0xf]
      %v1513 = vld [vmem:[%s1 + $0x48] sm:$0xf]
      %v1514 = vld [vmem:[%s1 + $0x4c] sm:$0xf]
      %v1515 = vld [vmem:[%s1 + $0x50] sm:$0xf]
      %v1516 = vld [vmem:[%s1 + $0x54] sm:$0xf]
      %v1517 = vld [vmem:[%s1 + $0x58] sm:$0xf]
      %v1518 = vld [vmem:[%s1 + $0x5c] sm:$0xf]
      %v1519 = vld [vmem:[%s1 + $0x60] sm:$0xf]
      %v1520 = vld [vmem:[%s1 + $0x64] sm:$0xf]
      %v1521 = vld [vmem:[%s1 + $0x68] sm:$0xf]
      %v1522 = vld [vmem:[%s1 + $0x6c] sm:$0xf]
      %v1523 = vld [vmem:[%s1 + $0x70] sm:$0xf]
      %v1524 = vld [vmem:[%s1 + $0x74] sm:$0xf]
      %v1525 = vld [vmem:[%s1 + $0x78] sm:$0xf]
      %v1526 = vld [vmem:[%s1 + $0x7c] sm:$0xf]
      %v1527 = vld [vmem:[%s1 + $0x80] sm:$0xf]
      %v1528 = vld [vmem:[%s1 + $0x84] sm:$0xf]
      %v1529 = vld [vmem:[%s1 + $0x88] sm:$0xf]
      %v1530 = vld [vmem:[%s1 + $0x8c] sm:$0xf]
      %v1531 = vld [vmem:[%s2] sm:$0x1]
      %v1533 = vperm.slane %v1531, 0
      %v1571 = vunpack.c.l.b16 %v1495
      %v1572 = vunpack.c.l.b16 %v1496
      %v1573 = vunpack.c.l.b16 %v1497
      %v1574 = vunpack.c.l.b16 %v1498
      %v1575 = vunpack.c.l.b16 %v1499
      %v1576 = vunpack.c.l.b16 %v1500
      %v1577 = vunpack.c.l.b16 %v1501
      %v1578 = vunpack.c.l.b16 %v1502
      %v1579 = vunpack.c.l.b16 %v1503
      %v1580 = vunpack.c.l.b16 %v1504
      %v1581 = vunpack.c.l.b16 %v1505
      %v1582 = vunpack.c.l.b16 %v1506
      %v1583 = vunpack.c.l.b16 %v1507
      %v1584 = vunpack.c.l.b16 %v1508
      %v1585 = vunpack.c.l.b16 %v1509
      %v1586 = vunpack.c.l.b16 %v1510
      %v1587 = vunpack.c.l.b16 %v1511
      %v1588 = vunpack.c.l.b16 %v1512
      %v1589 = vunpack.c.l.b16 %v1513
      %v1590 = vunpack.c.l.b16 %v1514
      %v1591 = vunpack.c.l.b16 %v1515
      %v1592 = vunpack.c.l.b16 %v1516
      %v1593 = vunpack.c.l.b16 %v1517
      %v1594 = vunpack.c.l.b16 %v1518
      %v1595 = vunpack.c.l.b16 %v1519
      %v1596 = vunpack.c.l.b16 %v1520
      %v1597 = vunpack.c.l.b16 %v1521
      %v1598 = vunpack.c.l.b16 %v1522
      %v1599 = vunpack.c.l.b16 %v1523
      %v1600 = vunpack.c.l.b16 %v1524
      %v1601 = vunpack.c.l.b16 %v1525
      %v1602 = vunpack.c.l.b16 %v1526
      %v1603 = vunpack.c.l.b16 %v1527
      %v1604 = vunpack.c.l.b16 %v1528
      %v1605 = vunpack.c.l.b16 %v1529
      %v1606 = vunpack.c.l.b16 %v1530
      %v1607 = vpack.c.b16 %v1572, %v1571
      %v1608 = vpack.c.b16 %v1574, %v1573
      %v1609 = vpack.c.b16 %v1576, %v1575
      %v1610 = vpack.c.b16 %v1578, %v1577
      %v1611 = vpack.c.b16 %v1580, %v1579
      %v1612 = vpack.c.b16 %v1582, %v1581
      %v1613 = vpack.c.b16 %v1584, %v1583
      %v1614 = vpack.c.b16 %v1586, %v1585
      %v1615 = vpack.c.b16 %v1588, %v1587
      %v1616 = vpack.c.b16 %v1590, %v1589
      %v1617 = vpack.c.b16 %v1592, %v1591
      %v1618 = vpack.c.b16 %v1594, %v1593
      %v1619 = vpack.c.b16 %v1596, %v1595
      %v1620 = vpack.c.b16 %v1598, %v1597
      %v1621 = vpack.c.b16 %v1600, %v1599
      %v1622 = vpack.c.b16 %v1602, %v1601
      %v1623 = vpack.c.b16 %v1604, %v1603
      %v1624 = vpack.c.b16 %v1606, %v1605
      %v1644 = vsel %vm1236, %v1044, 0
      %v1647 = vsel %vm1236, %v1045, 0
      %v1650 = vsel %vm1236, %v1046, 0
      %v1653 = vsel %vm1236, %v1047, 0
      %v1656 = vsel %vm1236, %v1048, 0
      %v1659 = vsel %vm1236, %v1049, 0
      %v1662 = vsel %vm1236, %v1050, 0
      %v1665 = vsel %vm1236, %v1051, 0
      %v1668 = vsel %vm1236, %v1052, 0
      %v1671 = vsel %vm1236, %v1053, 0
      %v1674 = vsel %vm1236, %v1054, 0
      %v1677 = vsel %vm1236, %v1055, 0
      %v1680 = vsel %vm1236, %v1056, 0
      %v1683 = vsel %vm1236, %v1057, 0
      %v1686 = vsel %vm1236, %v1130, 0
      %v1689 = vsel %vm1236, %v1235, 0
      %1691 = vmatpush.bf16.msra.mxu0 %v1614
      %1692 = vmatpush.bf16.msra.mxu0 %v1613
      %1693 = vmatpush.bf16.msra.mxu0 %v1612
      %1694 = vmatpush.bf16.msra.mxu0 %v1611
      %1695 = vmatpush.bf16.msra.mxu0 %v1610
      %1696 = vmatpush.bf16.msra.mxu0 %v1609
      %1697 = vmatpush.bf16.msra.mxu0 %v1608
      %1698 = vmatpush.bf16.msra.mxu0 %v1607
      %1699 = vmatmul.bf16.gmra.mxu0 %v1320
      %v1700 = vpop.f32.mrf.mxu0
      %v1701 = vadd.f32 %v1533, %v1700
      %v1702 = vpop.f32.mrf.mxu0
      %v1703 = vadd.f32 %v1533, %v1702
      %1704 = vmatmul.bf16.gmra.mxu0 %v1323
      %v1705 = vpop.f32.mrf.mxu0
      %v1706 = vadd.f32 %v1533, %v1705
      %v1707 = vpop.f32.mrf.mxu0
      %v1708 = vadd.f32 %v1533, %v1707
      %1709 = vmatmul.bf16.gmra.mxu0 %v1326
      %v1710 = vpop.f32.mrf.mxu0
      %v1711 = vadd.f32 %v1533, %v1710
      %v1712 = vpop.f32.mrf.mxu0
      %v1713 = vadd.f32 %v1533, %v1712
      %1714 = vmatmul.bf16.gmra.mxu0 %v1329
      %v1715 = vpop.f32.mrf.mxu0
      %v1716 = vadd.f32 %v1533, %v1715
      %v1717 = vpop.f32.mrf.mxu0
      %v1718 = vadd.f32 %v1533, %v1717
      %1719 = vmatmul.bf16.gmra.mxu0 %v1332
      %v1720 = vpop.f32.mrf.mxu0
      %v1721 = vadd.f32 %v1533, %v1720
      %v1722 = vpop.f32.mrf.mxu0
      %v1723 = vadd.f32 %v1533, %v1722
      %1724 = vmatmul.bf16.gmra.mxu0 %v1335
      %v1725 = vpop.f32.mrf.mxu0
      %v1726 = vadd.f32 %v1533, %v1725
      %v1727 = vpop.f32.mrf.mxu0
      %v1728 = vadd.f32 %v1533, %v1727
      %1729 = vmatmul.bf16.gmra.mxu0 %v1338
      %v1730 = vpop.f32.mrf.mxu0
      %v1731 = vadd.f32 %v1533, %v1730
      %v1732 = vpop.f32.mrf.mxu0
      %v1733 = vadd.f32 %v1533, %v1732
      %1734 = vmatmul.bf16.gmra.mxu0 %v1341
      %v1735 = vpop.f32.mrf.mxu0
      %v1736 = vadd.f32 %v1533, %v1735
      %v1737 = vpop.f32.mrf.mxu0
      %v1738 = vadd.f32 %v1533, %v1737
      %1739 = vmatmul.bf16.gmra.mxu0 %v1344
      %v1740 = vpop.f32.mrf.mxu0
      %v1741 = vadd.f32 %v1533, %v1740
      %v1742 = vpop.f32.mrf.mxu0
      %v1743 = vadd.f32 %v1533, %v1742
      %1744 = vmatmul.bf16.gmra.mxu0 %v1347
      %v1745 = vpop.f32.mrf.mxu0
      %v1746 = vadd.f32 %v1533, %v1745
      %v1747 = vpop.f32.mrf.mxu0
      %v1748 = vadd.f32 %v1533, %v1747
      %1749 = vmatmul.bf16.gmra.mxu0 %v1350
      %v1750 = vpop.f32.mrf.mxu0
      %v1751 = vadd.f32 %v1533, %v1750
      %v1752 = vpop.f32.mrf.mxu0
      %v1753 = vadd.f32 %v1533, %v1752
      %1754 = vmatmul.bf16.gmra.mxu0 %v1353
      %v1755 = vpop.f32.mrf.mxu0
      %v1756 = vadd.f32 %v1533, %v1755
      %v1757 = vpop.f32.mrf.mxu0
      %v1758 = vadd.f32 %v1533, %v1757
      %1759 = vmatmul.bf16.gmra.mxu0 %v1356
      %v1760 = vpop.f32.mrf.mxu0
      %v1761 = vadd.f32 %v1533, %v1760
      %v1762 = vpop.f32.mrf.mxu0
      %v1763 = vadd.f32 %v1533, %v1762
      %1764 = vmatmul.bf16.gmra.mxu0 %v1359
      %v1765 = vpop.f32.mrf.mxu0
      %v1766 = vadd.f32 %v1533, %v1765
      %v1767 = vpop.f32.mrf.mxu0
      %v1768 = vadd.f32 %v1533, %v1767
      %1769 = vmatmul.bf16.gmra.mxu0 %v1362
      %v1770 = vpop.f32.mrf.mxu0
      %v1771 = vadd.f32 %v1533, %v1770
      %v1772 = vpop.f32.mrf.mxu0
      %v1773 = vadd.f32 %v1533, %v1772
      %1774 = vmatmul.bf16.gmra.mxu0 %v1365
      %v1775 = vpop.f32.mrf.mxu0
      %v1776 = vadd.f32 %v1533, %v1775
      %v1777 = vpop.f32.mrf.mxu0
      %v1778 = vadd.f32 %v1533, %v1777
      %1779 = vdwg.mxu0
      %1780 = vmatpush.bf16.msra.mxu0 %v1622
      %1781 = vmatpush.bf16.msra.mxu0 %v1621
      %1782 = vmatpush.bf16.msra.mxu0 %v1620
      %1783 = vmatpush.bf16.msra.mxu0 %v1619
      %1784 = vmatpush.bf16.msra.mxu0 %v1618
      %1785 = vmatpush.bf16.msra.mxu0 %v1617
      %1786 = vmatpush.bf16.msra.mxu0 %v1616
      %1787 = vmatpush.bf16.msra.mxu0 %v1615
      %1788 = vmatmul.bf16.gmra.mxu0 %v1448
      %v1789 = vpop.f32.mrf.mxu0
      %v1790 = vadd.f32 %v1701, %v1789
      %v1791 = vpop.f32.mrf.mxu0
      %v1792 = vadd.f32 %v1703, %v1791
      %1793 = vmatmul.bf16.gmra.mxu0 %v1451
      %v1794 = vpop.f32.mrf.mxu0
      %v1795 = vadd.f32 %v1706, %v1794
      %v1796 = vpop.f32.mrf.mxu0
      %v1797 = vadd.f32 %v1708, %v1796
      %1798 = vmatmul.bf16.gmra.mxu0 %v1454
      %v1799 = vpop.f32.mrf.mxu0
      %v1800 = vadd.f32 %v1711, %v1799
      %v1801 = vpop.f32.mrf.mxu0
      %v1802 = vadd.f32 %v1713, %v1801
      %1803 = vmatmul.bf16.gmra.mxu0 %v1457
      %v1804 = vpop.f32.mrf.mxu0
      %v1805 = vadd.f32 %v1716, %v1804
      %v1806 = vpop.f32.mrf.mxu0
      %v1807 = vadd.f32 %v1718, %v1806
      %1808 = vmatmul.bf16.gmra.mxu0 %v1460
      %v1809 = vpop.f32.mrf.mxu0
      %v1810 = vadd.f32 %v1721, %v1809
      %v1811 = vpop.f32.mrf.mxu0
      %v1812 = vadd.f32 %v1723, %v1811
      %1813 = vmatmul.bf16.gmra.mxu0 %v1463
      %v1814 = vpop.f32.mrf.mxu0
      %v1815 = vadd.f32 %v1726, %v1814
      %v1816 = vpop.f32.mrf.mxu0
      %v1817 = vadd.f32 %v1728, %v1816
      %1818 = vmatmul.bf16.gmra.mxu0 %v1466
      %v1819 = vpop.f32.mrf.mxu0
      %v1820 = vadd.f32 %v1731, %v1819
      %v1821 = vpop.f32.mrf.mxu0
      %v1822 = vadd.f32 %v1733, %v1821
      %1823 = vmatmul.bf16.gmra.mxu0 %v1469
      %v1824 = vpop.f32.mrf.mxu0
      %v1825 = vadd.f32 %v1736, %v1824
      %v1826 = vpop.f32.mrf.mxu0
      %v1827 = vadd.f32 %v1738, %v1826
      %1828 = vmatmul.bf16.gmra.mxu0 %v1472
      %v1829 = vpop.f32.mrf.mxu0
      %v1830 = vadd.f32 %v1741, %v1829
      %v1831 = vpop.f32.mrf.mxu0
      %v1832 = vadd.f32 %v1743, %v1831
      %1833 = vmatmul.bf16.gmra.mxu0 %v1475
      %v1834 = vpop.f32.mrf.mxu0
      %v1835 = vadd.f32 %v1746, %v1834
      %v1836 = vpop.f32.mrf.mxu0
      %v1837 = vadd.f32 %v1748, %v1836
      %1838 = vmatmul.bf16.gmra.mxu0 %v1478
      %v1839 = vpop.f32.mrf.mxu0
      %v1840 = vadd.f32 %v1751, %v1839
      %v1841 = vpop.f32.mrf.mxu0
      %v1842 = vadd.f32 %v1753, %v1841
      %1843 = vmatmul.bf16.gmra.mxu0 %v1481
      %v1844 = vpop.f32.mrf.mxu0
      %v1845 = vadd.f32 %v1756, %v1844
      %v1846 = vpop.f32.mrf.mxu0
      %v1847 = vadd.f32 %v1758, %v1846
      %1848 = vmatmul.bf16.gmra.mxu0 %v1484
      %v1849 = vpop.f32.mrf.mxu0
      %v1850 = vadd.f32 %v1761, %v1849
      %v1851 = vpop.f32.mrf.mxu0
      %v1852 = vadd.f32 %v1763, %v1851
      %1853 = vmatmul.bf16.gmra.mxu0 %v1487
      %v1854 = vpop.f32.mrf.mxu0
      %v1855 = vadd.f32 %v1766, %v1854
      %v1856 = vpop.f32.mrf.mxu0
      %v1857 = vadd.f32 %v1768, %v1856
      %1858 = vmatmul.bf16.gmra.mxu0 %v1490
      %v1859 = vpop.f32.mrf.mxu0
      %v1860 = vadd.f32 %v1771, %v1859
      %v1861 = vpop.f32.mrf.mxu0
      %v1862 = vadd.f32 %v1773, %v1861
      %1863 = vmatmul.bf16.gmra.mxu0 %v1493
      %v1864 = vpop.f32.mrf.mxu0
      %v1865 = vadd.f32 %v1776, %v1864
      %v1866 = vpop.f32.mrf.mxu0
      %v1867 = vadd.f32 %v1778, %v1866
      %1868 = vdwg.mxu0
      %1869 = vmatpush.bf16.msra.mxu0 0
      %1870 = vmatpush.bf16.msra.mxu0 0
      %1871 = vmatpush.bf16.msra.mxu0 0
      %1872 = vmatpush.bf16.msra.mxu0 0
      %1873 = vmatpush.bf16.msra.mxu0 0
      %1874 = vmatpush.bf16.msra.mxu0 0
      %1875 = vmatpush.bf16.msra.mxu0 %v1624
      %1876 = vmatpush.bf16.msra.mxu0 %v1623
      %1877 = vmatmul.bf16.gmra.mxu0 %v1644
      %v1878 = vpop.f32.mrf.mxu0
      %v1879 = vadd.f32 %v1790, %v1878
      %v1880 = vpop.f32.mrf.mxu0
      %v1881 = vadd.f32 %v1792, %v1880
      %1882 = vmatmul.bf16.gmra.mxu0 %v1647
      %v1883 = vpop.f32.mrf.mxu0
      %v1884 = vadd.f32 %v1795, %v1883
      %v1885 = vpop.f32.mrf.mxu0
      %v1886 = vadd.f32 %v1797, %v1885
      %1887 = vmatmul.bf16.gmra.mxu0 %v1650
      %v1888 = vpop.f32.mrf.mxu0
      %v1889 = vadd.f32 %v1800, %v1888
      %v1890 = vpop.f32.mrf.mxu0
      %v1891 = vadd.f32 %v1802, %v1890
      %1892 = vmatmul.bf16.gmra.mxu0 %v1653
      %v1893 = vpop.f32.mrf.mxu0
      %v1894 = vadd.f32 %v1805, %v1893
      %v1895 = vpop.f32.mrf.mxu0
      %v1896 = vadd.f32 %v1807, %v1895
      %1897 = vmatmul.bf16.gmra.mxu0 %v1656
      %v1898 = vpop.f32.mrf.mxu0
      %v1899 = vadd.f32 %v1810, %v1898
      %v1900 = vpop.f32.mrf.mxu0
      %v1901 = vadd.f32 %v1812, %v1900
      %1902 = vmatmul.bf16.gmra.mxu0 %v1659
      %v1903 = vpop.f32.mrf.mxu0
      %v1904 = vadd.f32 %v1815, %v1903
      %v1905 = vpop.f32.mrf.mxu0
      %v1906 = vadd.f32 %v1817, %v1905
      %1907 = vmatmul.bf16.gmra.mxu0 %v1662
      %v1908 = vpop.f32.mrf.mxu0
      %v1909 = vadd.f32 %v1820, %v1908
      %v1910 = vpop.f32.mrf.mxu0
      %v1911 = vadd.f32 %v1822, %v1910
      %1912 = vmatmul.bf16.gmra.mxu0 %v1665
      %v1913 = vpop.f32.mrf.mxu0
      %v1914 = vadd.f32 %v1825, %v1913
      %v1915 = vpop.f32.mrf.mxu0
      %v1916 = vadd.f32 %v1827, %v1915
      %1917 = vmatmul.bf16.gmra.mxu0 %v1668
      %v1918 = vpop.f32.mrf.mxu0
      %v1919 = vadd.f32 %v1830, %v1918
      %v1920 = vpop.f32.mrf.mxu0
      %v1921 = vadd.f32 %v1832, %v1920
      %1922 = vmatmul.bf16.gmra.mxu0 %v1671
      %v1923 = vpop.f32.mrf.mxu0
      %v1924 = vadd.f32 %v1835, %v1923
      %v1925 = vpop.f32.mrf.mxu0
      %v1926 = vadd.f32 %v1837, %v1925
      %1927 = vmatmul.bf16.gmra.mxu0 %v1674
      %v1928 = vpop.f32.mrf.mxu0
      %v1929 = vadd.f32 %v1840, %v1928
      %v1930 = vpop.f32.mrf.mxu0
      %v1931 = vadd.f32 %v1842, %v1930
      %1932 = vmatmul.bf16.gmra.mxu0 %v1677
      %v1933 = vpop.f32.mrf.mxu0
      %v1934 = vadd.f32 %v1845, %v1933
      %v1935 = vpop.f32.mrf.mxu0
      %v1936 = vadd.f32 %v1847, %v1935
      %1937 = vmatmul.bf16.gmra.mxu0 %v1680
      %v1938 = vpop.f32.mrf.mxu0
      %v1939 = vadd.f32 %v1850, %v1938
      %v1940 = vpop.f32.mrf.mxu0
      %v1941 = vadd.f32 %v1852, %v1940
      %1942 = vmatmul.bf16.gmra.mxu0 %v1683
      %v1943 = vpop.f32.mrf.mxu0
      %v1944 = vadd.f32 %v1855, %v1943
      %v1945 = vpop.f32.mrf.mxu0
      %v1946 = vadd.f32 %v1857, %v1945
      %1947 = vmatmul.bf16.gmra.mxu0 %v1686
      %v1948 = vpop.f32.mrf.mxu0
      %v1949 = vadd.f32 %v1860, %v1948
      %v1950 = vpop.f32.mrf.mxu0
      %v1951 = vadd.f32 %v1862, %v1950
      %1952 = vmatmul.bf16.gmra.mxu0 %v1689
      %v1953 = vpop.f32.mrf.mxu0
      %v1954 = vadd.f32 %v1865, %v1953
      %v1955 = vpop.f32.mrf.mxu0
      %v1956 = vadd.f32 %v1867, %v1955
      %1957 = vdwg.mxu0
      %1958 = vst.msk [vmem:[%s204] sm:$0xff] %vm1236, %v1879
      %1959 = vst.msk [vmem:[%s204 + $0x8] sm:$0xff] %vm1236, %v1881
      %1960 = vst.msk [vmem:[%s204 + $0x10] sm:$0xff] %vm1236, %v1884
      %1961 = vst.msk [vmem:[%s204 + $0x18] sm:$0xff] %vm1236, %v1886
      %1962 = vst.msk [vmem:[%s204 + $0x20] sm:$0xff] %vm1236, %v1889
      %1963 = vst.msk [vmem:[%s204 + $0x28] sm:$0xff] %vm1236, %v1891
      %1964 = vst.msk [vmem:[%s204 + $0x30] sm:$0xff] %vm1236, %v1894
      %1965 = vst.msk [vmem:[%s204 + $0x38] sm:$0xff] %vm1236, %v1896
      %1966 = vst.msk [vmem:[%s204 + $0x40] sm:$0xff] %vm1236, %v1899
      %1967 = vst.msk [vmem:[%s204 + $0x48] sm:$0xff] %vm1236, %v1901
      %1968 = vst.msk [vmem:[%s204 + $0x50] sm:$0xff] %vm1236, %v1904
      %1969 = vst.msk [vmem:[%s204 + $0x58] sm:$0xff] %vm1236, %v1906
      %1970 = vst.msk [vmem:[%s204 + $0x60] sm:$0xff] %vm1236, %v1909
      %1971 = vst.msk [vmem:[%s204 + $0x68] sm:$0xff] %vm1236, %v1911
      %1972 = vst.msk [vmem:[%s204 + $0x70] sm:$0xff] %vm1236, %v1914
      %1973 = vst.msk [vmem:[%s204 + $0x78] sm:$0xff] %vm1236, %v1916
      %1974 = vst.msk [vmem:[%s204 + $0x80] sm:$0xff] %vm1236, %v1919
      %1975 = vst.msk [vmem:[%s204 + $0x88] sm:$0xff] %vm1236, %v1921
      %1976 = vst.msk [vmem:[%s204 + $0x90] sm:$0xff] %vm1236, %v1924
      %1977 = vst.msk [vmem:[%s204 + $0x98] sm:$0xff] %vm1236, %v1926
      %1978 = vst.msk [vmem:[%s204 + $0xa0] sm:$0xff] %vm1236, %v1929
      %1979 = vst.msk [vmem:[%s204 + $0xa8] sm:$0xff] %vm1236, %v1931
      %1980 = vst.msk [vmem:[%s204 + $0xb0] sm:$0xff] %vm1236, %v1934
      %1981 = vst.msk [vmem:[%s204 + $0xb8] sm:$0xff] %vm1236, %v1936
      %1982 = vst.msk [vmem:[%s204 + $0xc0] sm:$0xff] %vm1236, %v1939
      %1983 = vst.msk [vmem:[%s204 + $0xc8] sm:$0xff] %vm1236, %v1941
      %1984 = vst.msk [vmem:[%s204 + $0xd0] sm:$0xff] %vm1236, %v1944
      %1985 = vst.msk [vmem:[%s204 + $0xd8] sm:$0xff] %vm1236, %v1946
      %1986 = vst.msk [vmem:[%s204 + $0xe0] sm:$0xff] %vm1236, %v1949
      %1987 = vst.msk [vmem:[%s204 + $0xe8] sm:$0xff] %vm1236, %v1951
      %1988 = vst.msk [vmem:[%s204 + $0xf0] sm:$0xff] %vm1236, %v1954
      %1989 = vst.msk [vmem:[%s204 + $0xf8] sm:$0xff] %vm1236, %v1956
      %v1990 = vsel %vm1236, %v1879, 0.0
      %v1991 = vsel %vm1236, %v1881, 0.0
      %v1992 = vadd.f32 %v1990, %v1991
      %v1993 = vsel %vm1236, %v1884, 0.0
      %v1994 = vadd.f32 %v1992, %v1993
      %v1995 = vsel %vm1236, %v1886, 0.0
      %v1996 = vadd.f32 %v1994, %v1995
      %v1997 = vsel %vm1236, %v1889, 0.0
      %v1998 = vadd.f32 %v1996, %v1997
      %v1999 = vsel %vm1236, %v1891, 0.0
      %v2000 = vadd.f32 %v1998, %v1999
      %v2001 = vsel %vm1236, %v1894, 0.0
      %v2002 = vadd.f32 %v2000, %v2001
      %v2003 = vsel %vm1236, %v1896, 0.0
      %v2004 = vadd.f32 %v2002, %v2003
      %v2005 = vsel %vm1236, %v1899, 0.0
      %v2006 = vadd.f32 %v2004, %v2005
      %v2007 = vsel %vm1236, %v1901, 0.0
      %v2008 = vadd.f32 %v2006, %v2007
      %v2009 = vsel %vm1236, %v1904, 0.0
      %v2010 = vadd.f32 %v2008, %v2009
      %v2011 = vsel %vm1236, %v1906, 0.0
      %v2012 = vadd.f32 %v2010, %v2011
      %v2013 = vsel %vm1236, %v1909, 0.0
      %v2014 = vadd.f32 %v2012, %v2013
      %v2015 = vsel %vm1236, %v1911, 0.0
      %v2016 = vadd.f32 %v2014, %v2015
      %v2017 = vsel %vm1236, %v1914, 0.0
      %v2018 = vadd.f32 %v2016, %v2017
      %v2019 = vsel %vm1236, %v1916, 0.0
      %v2020 = vadd.f32 %v2018, %v2019
      %v2021 = vsel %vm1236, %v1919, 0.0
      %v2022 = vadd.f32 %v2020, %v2021
      %v2023 = vsel %vm1236, %v1921, 0.0
      %v2024 = vadd.f32 %v2022, %v2023
      %v2025 = vsel %vm1236, %v1924, 0.0
      %v2026 = vadd.f32 %v2024, %v2025
      %v2027 = vsel %vm1236, %v1926, 0.0
      %v2028 = vadd.f32 %v2026, %v2027
      %v2029 = vsel %vm1236, %v1929, 0.0
      %v2030 = vadd.f32 %v2028, %v2029
      %v2031 = vsel %vm1236, %v1931, 0.0
      %v2032 = vadd.f32 %v2030, %v2031
      %v2033 = vsel %vm1236, %v1934, 0.0
      %v2034 = vadd.f32 %v2032, %v2033
      %v2035 = vsel %vm1236, %v1936, 0.0
      %v2036 = vadd.f32 %v2034, %v2035
      %v2037 = vsel %vm1236, %v1939, 0.0
      %v2038 = vadd.f32 %v2036, %v2037
      %v2039 = vsel %vm1236, %v1941, 0.0
      %v2040 = vadd.f32 %v2038, %v2039
      %v2041 = vsel %vm1236, %v1944, 0.0
      %v2042 = vadd.f32 %v2040, %v2041
      %v2043 = vsel %vm1236, %v1946, 0.0
      %v2044 = vadd.f32 %v2042, %v2043
      %v2045 = vsel %vm1236, %v1949, 0.0
      %v2046 = vadd.f32 %v2044, %v2045
      %v2047 = vsel %vm1236, %v1951, 0.0
      %v2048 = vadd.f32 %v2046, %v2047
      %v2049 = vsel %vm1236, %v1954, 0.0
      %v2050 = vadd.f32 %v2048, %v2049
      %v2051 = vsel %vm1236, %v1956, 0.0
      %v2052 = vadd.f32 %v2050, %v2051
      %v2053 = vrot.slane %v2052, 4
      %v2054 = vadd.f32 %v2052, %v2053
      %v2055 = vrot.slane %v2054, 2
      %v2056 = vadd.f32 %v2054, %v2055
      %v2057 = vrot.slane %v2056, 1
      %v2058 = vadd.f32 %v2056, %v2057
      %v2059 = vmul.f32 %v1879, %v1879
      %v2060 = vmul.f32 %v1881, %v1881
      %v2061 = vmul.f32 %v1884, %v1884
      %v2062 = vmul.f32 %v1886, %v1886
      %v2063 = vmul.f32 %v1889, %v1889
      %v2064 = vmul.f32 %v1891, %v1891
      %v2065 = vmul.f32 %v1894, %v1894
      %v2066 = vmul.f32 %v1896, %v1896
      %v2067 = vmul.f32 %v1899, %v1899
      %v2068 = vmul.f32 %v1901, %v1901
      %v2069 = vmul.f32 %v1904, %v1904
      %v2070 = vmul.f32 %v1906, %v1906
      %v2071 = vmul.f32 %v1909, %v1909
      %v2072 = vmul.f32 %v1911, %v1911
      %v2073 = vmul.f32 %v1914, %v1914
      %v2074 = vmul.f32 %v1916, %v1916
      %v2075 = vmul.f32 %v1919, %v1919
      %v2076 = vmul.f32 %v1921, %v1921
      %v2077 = vmul.f32 %v1924, %v1924
      %v2078 = vmul.f32 %v1926, %v1926
      %v2079 = vmul.f32 %v1929, %v1929
      %v2080 = vmul.f32 %v1931, %v1931
      %v2081 = vmul.f32 %v1934, %v1934
      %v2082 = vmul.f32 %v1936, %v1936
      %v2083 = vmul.f32 %v1939, %v1939
      %v2084 = vmul.f32 %v1941, %v1941
      %v2085 = vmul.f32 %v1944, %v1944
      %v2086 = vmul.f32 %v1946, %v1946
      %v2087 = vmul.f32 %v1949, %v1949
      %v2088 = vmul.f32 %v1951, %v1951
      %v2089 = vmul.f32 %v1954, %v1954
      %v2090 = vmul.f32 %v1956, %v1956
      %v2091 = vsel %vm1236, %v2059, 0.0
      %v2092 = vsel %vm1236, %v2060, 0.0
      %v2093 = vadd.f32 %v2091, %v2092
      %v2094 = vsel %vm1236, %v2061, 0.0
      %v2095 = vadd.f32 %v2093, %v2094
      %v2096 = vsel %vm1236, %v2062, 0.0
      %v2097 = vadd.f32 %v2095, %v2096
      %v2098 = vsel %vm1236, %v2063, 0.0
      %v2099 = vadd.f32 %v2097, %v2098
      %v2100 = vsel %vm1236, %v2064, 0.0
      %v2101 = vadd.f32 %v2099, %v2100
      %v2102 = vsel %vm1236, %v2065, 0.0
      %v2103 = vadd.f32 %v2101, %v2102
      %v2104 = vsel %vm1236, %v2066, 0.0
      %v2105 = vadd.f32 %v2103, %v2104
      %v2106 = vsel %vm1236, %v2067, 0.0
      %v2107 = vadd.f32 %v2105, %v2106
      %v2108 = vsel %vm1236, %v2068, 0.0
      %v2109 = vadd.f32 %v2107, %v2108
      %v2110 = vsel %vm1236, %v2069, 0.0
      %v2111 = vadd.f32 %v2109, %v2110
      %v2112 = vsel %vm1236, %v2070, 0.0
      %v2113 = vadd.f32 %v2111, %v2112
      %v2114 = vsel %vm1236, %v2071, 0.0
      %v2115 = vadd.f32 %v2113, %v2114
      %v2116 = vsel %vm1236, %v2072, 0.0
      %v2117 = vadd.f32 %v2115, %v2116
      %v2118 = vsel %vm1236, %v2073, 0.0
      %v2119 = vadd.f32 %v2117, %v2118
      %v2120 = vsel %vm1236, %v2074, 0.0
      %v2121 = vadd.f32 %v2119, %v2120
      %v2122 = vsel %vm1236, %v2075, 0.0
      %v2123 = vadd.f32 %v2121, %v2122
      %v2124 = vsel %vm1236, %v2076, 0.0
      %v2125 = vadd.f32 %v2123, %v2124
      %v2126 = vsel %vm1236, %v2077, 0.0
      %v2127 = vadd.f32 %v2125, %v2126
      %v2128 = vsel %vm1236, %v2078, 0.0
      %v2129 = vadd.f32 %v2127, %v2128
      %v2130 = vsel %vm1236, %v2079, 0.0
      %v2131 = vadd.f32 %v2129, %v2130
      %v2132 = vsel %vm1236, %v2080, 0.0
      %v2133 = vadd.f32 %v2131, %v2132
      %v2134 = vsel %vm1236, %v2081, 0.0
      %v2135 = vadd.f32 %v2133, %v2134
      %v2136 = vsel %vm1236, %v2082, 0.0
      %v2137 = vadd.f32 %v2135, %v2136
      %v2138 = vsel %vm1236, %v2083, 0.0
      %v2139 = vadd.f32 %v2137, %v2138
      %v2140 = vsel %vm1236, %v2084, 0.0
      %v2141 = vadd.f32 %v2139, %v2140
      %v2142 = vsel %vm1236, %v2085, 0.0
      %v2143 = vadd.f32 %v2141, %v2142
      %v2144 = vsel %vm1236, %v2086, 0.0
      %v2145 = vadd.f32 %v2143, %v2144
      %v2146 = vsel %vm1236, %v2087, 0.0
      %v2147 = vadd.f32 %v2145, %v2146
      %v2148 = vsel %vm1236, %v2088, 0.0
      %v2149 = vadd.f32 %v2147, %v2148
      %v2150 = vsel %vm1236, %v2089, 0.0
      %v2151 = vadd.f32 %v2149, %v2150
      %v2152 = vsel %vm1236, %v2090, 0.0
      %v2153 = vadd.f32 %v2151, %v2152
      %v2154 = vrot.slane %v2153, 4
      %v2155 = vadd.f32 %v2153, %v2154
      %v2156 = vrot.slane %v2155, 2
      %v2157 = vadd.f32 %v2155, %v2156
      %v2158 = vrot.slane %v2157, 1
      %v2159 = vadd.f32 %v2157, %v2158
      %vm2160 = vcmask 1040384
      %v2161 = vsel %vm2160, %v2058, %v2159
      %vm2162 = vcmask 254976
      %2163 = vst.msk [vmem:[%s208] sm:$0x3] %vm2162, %v2161
      %p2164 = scmp.lt.s32.totalorder %s16, 1
      %s2165 = scalar_select %p2164, %s16, 1
      %s2166 = smul.addr %s2165, 32
      %s2167 = smul.addr %s2166, 8
      %s2168 = scalar_lea.vmem %s3, %s2167
      %p2169 = scmp.lt.s32.totalorder %s16, 1
      %s2170 = scalar_select %p2169, %s16, 1
      %s2171 = smul.addr %s2170, 2
      %s2172 = scalar_lea.vmem %s4, %s2171
      // Predicated region
      $region33: #{module_forward.4} parent=31 // pred_check
        %p2173 = pneg %p102
      $region34: #{module_forward.4} parent=31 // pred_check_branch
        %2175 = sbr.rel (%p2173) target = $region36
      $region35: #{module_forward.4} parent=31 // pred_region
        _
      $region36: #{module_forward.4} parent=31 // pred_fallthru
        _
      // Predicated region
      $region37: #{module_forward.4} parent=31 // pred_check
        %p2176 = pneg %p128
      $region38: #{module_forward.4} parent=31 // pred_check_branch
        %2178 = sbr.rel (%p2176) target = $region40
      $region39: #{module_forward.4} parent=31 // pred_region
        _
      $region40: #{module_forward.4} parent=31 // pred_fallthru
        _
    $region32: #{module_forward.4} parent=5 // pred_fallthru
      _
    %p2179 = scmp.le.s32.totalorder 2, %s11
    // Predicated region
    $region41: #{module_forward.4} parent=5 // pred_check
      %p2180 = pneg %p2179
    $region42: #{module_forward.4} parent=5 // pred_check_branch
      %2182 = sbr.rel (%p2180) target = $region44
    $region43: #{module_forward.4} parent=5 // pred_region
      %s2183 = ssub.s32 %s11, 2
      // Predicated region
      $region45: #{module_forward.4} parent=43 // pred_check
        %p2184 = pneg %p108
      $region46: #{module_forward.4} parent=43 // pred_check_branch
        %2186 = sbr.rel (%p2184) target = $region48
      $region47: #{module_forward.4} parent=43 // pred_region
        %p2187 = scmp.lt.s32.totalorder %s17, 1
        %s2188 = scalar_select %p2187, %s17, 1
        %s2189 = smul.addr %s2188, 32
        %s2190 = smul.addr %s2189, 8
        %s2191 = scalar_lea.vmem %s3, %s2190
      $region48: #{module_forward.4} parent=43 // pred_fallthru
        _
      // Predicated region
      $region49: #{module_forward.4} parent=43 // pred_check
        %p2192 = pneg %p134
      $region50: #{module_forward.4} parent=43 // pred_check_branch
        %2194 = sbr.rel (%p2192) target = $region52
      $region51: #{module_forward.4} parent=43 // pred_region
        %p2195 = scmp.lt.s32.totalorder %s17, 1
        %s2196 = scalar_select %p2195, %s17, 1
        %s2197 = smul.addr %s2196, 2
        %s2198 = scalar_lea.vmem %s4, %s2197
      $region52: #{module_forward.4} parent=43 // pred_fallthru
        _
    $region44: #{module_forward.4} parent=5 // pred_fallthru
      _
  $region6: #{module_forward.4} parent=0 // loop_footer
    %s15 = sadd.s32 1, %s11
  $region7: #{module_forward.4} parent=0 // loop_footer_branch
    %10 = sbr.rel target = $region3
  $region8: #{module_forward.4} parent=0 // loop_exit
    _

</llo_original>
